<compile_context>
chip_gen: v7x
topology: tpu7x:2x2x1
jax: 0.10.0
libtpu: 0.0.40
codegen_flags: <defaults>
</compile_context>

<pallas_src>
import functools

import jax
import jax.numpy as jnp
from jax.experimental import pallas as pl
from jax.experimental.pallas import tpu as pltpu

EPS = 1e-5  # nn.BatchNorm2d default


# ----------------------------------------------------------------------------- kernel
def _conv_stats_kernel(*refs, apply_act, B, H, SecW, WCout):
    """One 3x3 conv (one bf16 MXU matmul) + BN partial stats for a tile of B images.

    refs (apply_act=True):  x, G, a, c, y, stats, slab
    refs (apply_act=False): x, G,        y, stats, slab
      x     : (B*H, SecW)      lane-dense flat input (zero lane-pad beyond W*Cin)
      G     : (3*SecW, WCout)  block-Toeplitz weights, bf16
      a, c  : (1, SecW)        folded BN scale/shift of the *previous* layer
      y     : (B*H, WCout)     raw conv output
      stats : (2, WCout)       per-column [mean, centered M2] over the B*H rows
      slab  : (B*H, 3*SecW)    VMEM scratch
    """
    if apply_act:
        x_ref, g_ref, a_ref, c_ref, y_ref, stats_ref, slab_ref = refs
    else:
        x_ref, g_ref, y_ref, stats_ref, slab_ref = refs
    M = B * H

    x = x_ref[...]                                             # (M, SecW) f32, lane-dense
    if apply_act:
        # fused BN(prev layer) + ReLU, f32 on the VPU
        x = jnp.maximum(x * a_ref[...] + c_ref[...], 0.0)

    # ---- halo-free row slab: slab[r] = [x[r-1] | x[r] | x[r+1]], zero at image borders.
    # Section offsets are multiples of SecW (>= 128-lane aligned); the kh=1 store is a
    # full unmasked copy, kh=0/2 are single-row-shifted copies fixed up at image borders.
    zrow = jnp.zeros((1, SecW), jnp.float32)
    slab_ref[:, SecW:2 * SecW] = x                             # kh = 1
    slab_ref[1:M, 0:SecW] = x[0:M - 1, :]                      # kh = 0 (shift down)
    slab_ref[0:M - 1, 2 * SecW:3 * SecW] = x[1:M, :]           # kh = 2 (shift up)
    for b in range(B):                                         # per-image boundary rows -> 0
        slab_ref[b * H:b * H + 1, 0:SecW] = zrow
        slab_ref[(b + 1) * H - 1:(b + 1) * H, 2 * SecW:3 * SecW] = zrow

    # ---- single bf16 MXU matmul per conv: (M, 3*SecW) @ (3*SecW, WCout) -> f32
    y = jnp.dot(slab_ref[...].astype(jnp.bfloat16), g_ref[...],
                preferred_element_type=jnp.float32)
    y_ref[...] = y                                             # unmasked lane-dense store

    # ---- per-column BN partial stats (f32); Chan-combined across tiles in the wrapper
    mean = jnp.mean(y, axis=0, keepdims=True)                  # (1, WCout)
    d = y - mean
    stats_ref[0:1, :] = mean
    stats_ref[1:2, :] = jnp.sum(d * d, axis=0, keepdims=True)


# ----------------------------------------------------------------------------- wrappers
def _round_up(v, m):
    return ((v + m - 1) // m) * m


def _choose_b_tile(n, h, target_m=128):
    """Largest divisor of n with B_tile*H <= ~target_m, keeping >=2 grid steps if possible."""
    cap = max(1, target_m // max(h, 1))
    divs = [d for d in range(1, n + 1) if n % d == 0]
    pref = [d for d in divs if d <= cap and n // d >= 2]
    if pref:
        return max(pref)
    ok = [d for d in divs if d <= cap]
    return max(ok) if ok else 1


def _toeplitz_weight(w, W, SecW):
    """PyTorch (Cout, Cin, 3, 3) -> halo-free block-Toeplitz (3*SecW, W*Cout), bf16.

    Row index = ky*SecW + w_in*Cin + c_in (rows >= W*Cin in a section are zero pad),
    column index = w_out*Cout + c_out.  Out-of-range (w_out + kx - 1) taps are simply
    absent, which is exactly the zero padding of the conv.
    """
    Cout, Cin, KH, KW = w.shape
    wk = jnp.transpose(w, (2, 3, 1, 0)).astype(jnp.float32)    # (ky, kx, Cin, Cout)
    G = jnp.zeros((KH, W, Cin, W, Cout), jnp.float32)
    for kx in range(KW):
        # S[w_in, w_out] = 1 iff w_in = w_out + kx - 1
        S = jnp.eye(W, k=1 - kx, dtype=jnp.float32)
        G = G + jnp.einsum('pq,kco->kpcqo', S, wk[:, kx])      # (ky, w_in, Cin, w_out, Cout)
    G = G.reshape(KH, W * Cin, W * Cout)
    if SecW > W * Cin:
        G = jnp.pad(G, ((0, 0), (0, SecW - W * Cin), (0, 0)))
    return G.reshape(KH * SecW, W * Cout).astype(jnp.bfloat16)


def _conv_layer(x_rows, G, scale_t, shift_t, *, apply_act, B_tile, H, SecW, WCout):
    """One 3x3 conv (+ optional fused pre-activation) over batch tiles of B_tile images."""
    NH = x_rows.shape[0]
    M = B_tile * H
    num_tiles = NH // M
    kernel = functools.partial(_conv_stats_kernel, apply_act=apply_act,
                               B=B_tile, H=H, SecW=SecW, WCout=WCout)

    in_specs = [
        pl.BlockSpec((M, SecW), lambda t: (t, 0)),
        pl.BlockSpec(G.shape, lambda t: (0, 0)),
    ]
    inputs = [x_rows, G]
    if apply_act:
        in_specs += [pl.BlockSpec((1, SecW), lambda t: (0, 0)),
                     pl.BlockSpec((1, SecW), lambda t: (0, 0))]
        inputs += [scale_t, shift_t]

    y, stats = pl.pallas_call(
        kernel,
        grid=(num_tiles,),
        in_specs=in_specs,
        out_specs=[
            pl.BlockSpec((M, WCout), lambda t: (t, 0)),
            pl.BlockSpec((None, 2, WCout), lambda t: (t, 0, 0)),
        ],
        out_shape=[
            jax.ShapeDtypeStruct((NH, WCout), jnp.float32),
            jax.ShapeDtypeStruct((num_tiles, 2, WCout), jnp.float32),
        ],
        scratch_shapes=[pltpu.VMEM((M, 3 * SecW), jnp.float32)],
        compiler_params=pltpu.CompilerParams(
            dimension_semantics=("parallel",),            # megacore: split batch tiles across TCs
            vmem_limit_bytes=32 * 1024 * 1024),
    )(*inputs)
    return y, stats


def _folded_bn_params(stats, gamma, beta, group_rows, W, C):
    """Chan-combine per-(tile, column) partial stats -> folded BN scale/shift per channel."""
    T = stats.shape[0]
    means = stats[:, 0, :].reshape(T, W, C)
    m2s = stats[:, 1, :].reshape(T, W, C)
    mean = jnp.mean(means, axis=(0, 1))                                       # (C,)
    m2 = (jnp.sum(m2s, axis=(0, 1))
          + group_rows * jnp.sum((means - mean[None, None, :]) ** 2, axis=(0, 1)))
    var = m2 / (T * W * group_rows)                                           # biased (BN train mode)
    a = gamma.astype(jnp.float32) / jnp.sqrt(var + EPS)
    c = beta.astype(jnp.float32) - mean * a
    return a, c


@jax.jit
def double_conv(x_nchw, w1, b1, g1, be1, w2, b2, g2, be2):
    """x_nchw: (N, Cin, H, W) f32.  w*: PyTorch (Cout, Cin, 3, 3).  Returns (N, Cout, H, W)."""
    del b1, b2  # conv biases are exactly cancelled by train-mode BN mean subtraction
    N, Cin, H, W = x_nchw.shape
    Cout = w1.shape[0]
    WCin, WCout = W * Cin, W * Cout
    SecW1 = _round_up(WCin, 128)
    SecW2 = _round_up(WCout, 128)

    B_tile = _choose_b_tile(N, H)
    M = B_tile * H

    # NCHW -> lane-dense rows (N*H, W*Cin), zero lane-pad to SecW1 (once, in XLA).
    # TODO(synk): if the surrounding model can carry NHWC/lane-dense activations end-to-end,
    # drop these boundary transposes entirely.
    x_rows = jnp.transpose(x_nchw, (0, 2, 3, 1)).astype(jnp.float32).reshape(N * H, WCin)
    if SecW1 > WCin:
        x_rows = jnp.pad(x_rows, ((0, 0), (0, SecW1 - WCin)))

    G1 = _toeplitz_weight(w1, W, SecW1)   # bf16 (3*SecW1, WCout)
    G2 = _toeplitz_weight(w2, W, SecW2)   # bf16 (3*SecW2, WCout)

    # pass 1: conv1 raw + BN1 stat partials
    y1, stats1 = _conv_layer(x_rows, G1, None, None, apply_act=False,
                             B_tile=B_tile, H=H, SecW=SecW1, WCout=WCout)
    a1, c1 = _folded_bn_params(stats1, g1, be1, M, W, Cout)
    a1_t = jnp.tile(a1, W).reshape(1, WCout)
    c1_t = jnp.tile(c1, W).reshape(1, WCout)
    if SecW2 > WCout:
        y1 = jnp.pad(y1, ((0, 0), (0, SecW2 - WCout)))
        a1_t = jnp.pad(a1_t, ((0, 0), (0, SecW2 - WCout)))
        c1_t = jnp.pad(c1_t, ((0, 0), (0, SecW2 - WCout)))

    # pass 2: BN1+ReLU fused as in-kernel pre-activation, conv2 raw + BN2 stat partials
    y2, stats2 = _conv_layer(y1, G2, a1_t, c1_t, apply_act=True,
                             B_tile=B_tile, H=H, SecW=SecW2, WCout=WCout)
    a2, c2 = _folded_bn_params(stats2, g2, be2, M, W, Cout)

    # final BN2 + ReLU folded into XLA, fused with the NHWC -> NCHW output transpose
    out = jnp.maximum(y2.reshape(N, H, W, Cout) * a2[None, None, None, :]
                      + c2[None, None, None, :], 0.0)
    return jnp.transpose(out, (0, 3, 1, 2))          # back to NCHW


# ----------------------------------------------------------------------------- reference
def _reference(x, w1, b1, g1, be1, w2, b2, g2, be2):
    """Pure-JAX NCHW reference matching PyTorch DoubleConv (train-mode BN)."""
    def conv(x, w, b):
        y = jax.lax.conv_general_dilated(
            x, w, window_strides=(1, 1), padding=((1, 1), (1, 1)),
            dimension_numbers=("NCHW", "OIHW", "NCHW"))
        return y + b[None, :, None, None]

    def bn_relu(y, g, be):
        mean = y.mean(axis=(0, 2, 3), keepdims=True)
        var = y.var(axis=(0, 2, 3), keepdims=True)       # biased, as in BN
        yn = (y - mean) / jnp.sqrt(var + EPS)
        yn = yn * g[None, :, None, None] + be[None, :, None, None]
        return jnp.maximum(yn, 0.0)

    y = bn_relu(conv(x, w1, b1), g1, be1)
    return bn_relu(conv(y, w2, b2), g2, be2)


if __name__ == "__main__":
    N, Cin, Cout, H, W = 2, 4, 8, 16, 16
    key = jax.random.PRNGKey(0)
    kx, k1, kb1, k2, kb2 = jax.random.split(key, 5)

    x = jax.random.normal(kx, (N, Cin, H, W), jnp.float32)

    # deterministic synthetic params (shapes per nn.Conv2d / nn.BatchNorm2d)
    w1 = jax.random.normal(k1, (Cout, Cin, 3, 3), jnp.float32) * 0.2
    b1 = jax.random.normal(kb1, (Cout,), jnp.float32) * 0.1
    w2 = jax.random.normal(k2, (Cout, Cout, 3, 3), jnp.float32) * 0.2
    b2 = jax.random.normal(kb2, (Cout,), jnp.float32) * 0.1
    g1 = jnp.ones((Cout,), jnp.float32)    # BatchNorm2d default weight
    be1 = jnp.zeros((Cout,), jnp.float32)  # BatchNorm2d default bias
    g2 = jnp.ones((Cout,), jnp.float32)
    be2 = jnp.zeros((Cout,), jnp.float32)

    out = double_conv(x, w1, b1, g1, be1, w2, b2, g2, be2)
    out = jax.block_until_ready(out)

    ref = _reference(x, w1, b1, g1, be1, w2, b2, g2, be2)
    assert out.shape == (N, Cout, H, W)
    # Tolerance budget: the kernel now uses explicit single-pass bf16 MXU operands (per the
    # perf review), while the XLA f32 reference conv uses multi-pass (~f32-accurate) matmuls.
    # Two convs + two BNs of bf16-rounded products give a worst-case elementwise error of a
    # few 1e-2 on unit-scale outputs.
    assert jnp.allclose(out, ref, atol=4e-2, rtol=2e-2), \
        float(jnp.max(jnp.abs(out - ref)))

    print("KERNEL_OK")
</pallas_src>

<mosaic_0001>
module attributes {stable_mosaic.version = 11 : i64} {
  func.func @_conv_stats_kernel(%arg0: i32, %arg1: memref<16x128xf32, #tpu.memory_space<vmem>>, %arg2: memref<384x128xbf16, #tpu.memory_space<vmem>>, %arg3: memref<16x128xf32, #tpu.memory_space<vmem>>, %arg4: memref<1x2x128xf32, #tpu.memory_space<vmem>>, %arg5: memref<16x384xf32, #tpu.memory_space<vmem>>) attributes {dimension_semantics = [#tpu.dimension_semantics<parallel>], iteration_bounds = array<i64: 2>, scalar_prefetch = 0 : i64, scratch_operands = 1 : i64, tpu.core_type = #tpu.core_type<tc>, window_params = [{transform_indices = @transform_0, window_bounds = array<i64: 16, 128>}, {pipeline_mode = #tpu.pipeline_mode<synchronous>, transform_indices = @transform_1, window_bounds = array<i64: 384, 128>}, {transform_indices = @transform_2, window_bounds = array<i64: 16, 128>}, {transform_indices = @transform_3, window_bounds = array<i64: 1, 2, 128>}]} {
    %c0 = arith.constant 0 : index
    %c0_0 = arith.constant 0 : index
    %0 = vector.load %arg1[%c0, %c0_0] : memref<16x128xf32, #tpu.memory_space<vmem>>, vector<16x128xf32>
    %cst = arith.constant 0.000000e+00 : f32
    %1 = vector.broadcast %cst : f32 to vector<1x128xf32>
    %c0_1 = arith.constant 0 : index
    %c128 = arith.constant 128 : index
    %2 = vector.load %arg5[%c0_1, %c128] : memref<16x384xf32, #tpu.memory_space<vmem>>, vector<16x128xf32>
    tpu.vector_store %arg5[%c0_1, %c128], %0 {strides = array<i32>} : memref<16x384xf32, #tpu.memory_space<vmem>>, vector<16x128xf32>,
    %3 = vector.extract_strided_slice %0 {offsets = [0, 0], sizes = [15, 128], strides = [1, 1]} : vector<16x128xf32> to vector<15x128xf32>
    %c1 = arith.constant 1 : index
    %c0_2 = arith.constant 0 : index
    %4 = vector.load %arg5[%c1, %c0_2] : memref<16x384xf32, #tpu.memory_space<vmem>>, vector<15x128xf32>
    tpu.vector_store %arg5[%c1, %c0_2], %3 {strides = array<i32>} : memref<16x384xf32, #tpu.memory_space<vmem>>, vector<15x128xf32>,
    %5 = vector.extract_strided_slice %0 {offsets = [1, 0], sizes = [15, 128], strides = [1, 1]} : vector<16x128xf32> to vector<15x128xf32>
    %c0_3 = arith.constant 0 : index
    %c256 = arith.constant 256 : index
    %6 = vector.load %arg5[%c0_3, %c256] : memref<16x384xf32, #tpu.memory_space<vmem>>, vector<15x128xf32>
    tpu.vector_store %arg5[%c0_3, %c256], %5 {strides = array<i32>} : memref<16x384xf32, #tpu.memory_space<vmem>>, vector<15x128xf32>,
    %c0_4 = arith.constant 0 : index
    %c0_5 = arith.constant 0 : index
    %7 = vector.load %arg5[%c0_4, %c0_5] : memref<16x384xf32, #tpu.memory_space<vmem>>, vector<1x128xf32>
    tpu.vector_store %arg5[%c0_4, %c0_5], %1 {strides = array<i32>} : memref<16x384xf32, #tpu.memory_space<vmem>>, vector<1x128xf32>,
    %c15 = arith.constant 15 : index
    %c256_6 = arith.constant 256 : index
    %8 = vector.load %arg5[%c15, %c256_6] : memref<16x384xf32, #tpu.memory_space<vmem>>, vector<1x128xf32>
    tpu.vector_store %arg5[%c15, %c256_6], %1 {strides = array<i32>} : memref<16x384xf32, #tpu.memory_space<vmem>>, vector<1x128xf32>,
    %c0_7 = arith.constant 0 : index
    %c0_8 = arith.constant 0 : index
    %9 = vector.load %arg5[%c0_7, %c0_8] : memref<16x384xf32, #tpu.memory_space<vmem>>, vector<16x384xf32>
    %10 = arith.truncf %9 : vector<16x384xf32> to vector<16x384xbf16>
    %c0_9 = arith.constant 0 : index
    %c0_10 = arith.constant 0 : index
    %11 = vector.load %arg2[%c0_9, %c0_10] : memref<384x128xbf16, #tpu.memory_space<vmem>>, vector<384x128xbf16>
    %cst_11 = arith.constant dense<0.000000e+00> : vector<16x128xf32>
    %12 = tpu.matmul %10, %11, %cst_11 {dimension_numbers = #tpu.dot_dimension_numbers<[1], [0], [0], [1], [0, 0, 1, 1], [], []>} : vector<16x384xbf16>, vector<384x128xbf16>, vector<16x128xf32> -> vector<16x128xf32>
    %c0_12 = arith.constant 0 : index
    %c0_13 = arith.constant 0 : index
    %13 = vector.load %arg3[%c0_12, %c0_13] : memref<16x128xf32, #tpu.memory_space<vmem>>, vector<16x128xf32>
    tpu.vector_store %arg3[%c0_12, %c0_13], %12 {strides = array<i32>} : memref<16x128xf32, #tpu.memory_space<vmem>>, vector<16x128xf32>,
    %cst_14 = arith.constant dense<0.000000e+00> : vector<128xf32>
    %14 = vector.multi_reduction <add>, %12, %cst_14 [0] : vector<16x128xf32> to vector<128xf32>
    %15 = vector.shape_cast %14 : vector<128xf32> to vector<1x128xf32>
    %cst_15 = arith.constant 1.600000e+01 : f32
    %16 = vector.broadcast %cst_15 : f32 to vector<1x128xf32>
    %17 = arith.divf %15, %16 : vector<1x128xf32>
    %18 = vector.broadcast %17 : vector<1x128xf32> to vector<16x128xf32>
    %19 = arith.subf %12, %18 : vector<16x128xf32>
    %c0_16 = arith.constant 0 : index
    %c0_17 = arith.constant 0 : index
    %c0_18 = arith.constant 0 : index
    %20 = vector.load %arg4[%c0_16, %c0_17, %c0_18] : memref<1x2x128xf32, #tpu.memory_space<vmem>>, vector<1x1x128xf32>
    %21 = vector.shape_cast %20 : vector<1x1x128xf32> to vector<1x128xf32>
    %22 = vector.shape_cast %17 : vector<1x128xf32> to vector<1x1x128xf32>
    tpu.vector_store %arg4[%c0_16, %c0_17, %c0_18], %22 {strides = array<i32>} : memref<1x2x128xf32, #tpu.memory_space<vmem>>, vector<1x1x128xf32>,
    %23 = arith.mulf %19, %19 : vector<16x128xf32>
    %cst_19 = arith.constant dense<0.000000e+00> : vector<128xf32>
    %24 = vector.multi_reduction <add>, %23, %cst_19 [0] : vector<16x128xf32> to vector<128xf32>
    %25 = vector.shape_cast %24 : vector<128xf32> to vector<1x128xf32>
    %c0_20 = arith.constant 0 : index
    %c1_21 = arith.constant 1 : index
    %c0_22 = arith.constant 0 : index
    %26 = vector.load %arg4[%c0_20, %c1_21, %c0_22] : memref<1x2x128xf32, #tpu.memory_space<vmem>>, vector<1x1x128xf32>
    %27 = vector.shape_cast %26 : vector<1x1x128xf32> to vector<1x128xf32>
    %28 = vector.shape_cast %25 : vector<1x128xf32> to vector<1x1x128xf32>
    tpu.vector_store %arg4[%c0_20, %c1_21, %c0_22], %28 {strides = array<i32>} : memref<1x2x128xf32, #tpu.memory_space<vmem>>, vector<1x1x128xf32>,
    return
  }
  func.func @transform_0(%arg0: i32) -> (i32, i32) {
    %c0_i32 = arith.constant 0 : i32
    %c0_i32_0 = arith.constant 0 : i32
    return %arg0, %c0_i32 : i32, i32
  }
  func.func @transform_1(%arg0: i32) -> (i32, i32) {
    %c0_i32 = arith.constant 0 : i32
    %c0_i32_0 = arith.constant 0 : i32
    %c0_i32_1 = arith.constant 0 : i32
    return %c0_i32, %c0_i32_0 : i32, i32
  }
  func.func @transform_2(%arg0: i32) -> (i32, i32) {
    %c0_i32 = arith.constant 0 : i32
    %c0_i32_0 = arith.constant 0 : i32
    return %arg0, %c0_i32 : i32, i32
  }
  func.func @transform_3(%arg0: i32) -> (i32, i32, i32) {
    %c0_i32 = arith.constant 0 : i32
    %c0_i32_0 = arith.constant 0 : i32
    %c0_i32_1 = arith.constant 0 : i32
    return %arg0, %c0_i32, %c0_i32_0 : i32, i32, i32
  }
}

module attributes {stable_mosaic.version = 11 : i64} {
  func.func @_conv_stats_kernel(%arg0: i32, %arg1: memref<16x128xf32, #tpu.memory_space<vmem>>, %arg2: memref<384x128xbf16, #tpu.memory_space<vmem>>, %arg3: memref<1x128xf32, #tpu.memory_space<vmem>>, %arg4: memref<1x128xf32, #tpu.memory_space<vmem>>, %arg5: memref<16x128xf32, #tpu.memory_space<vmem>>, %arg6: memref<1x2x128xf32, #tpu.memory_space<vmem>>, %arg7: memref<16x384xf32, #tpu.memory_space<vmem>>) attributes {dimension_semantics = [#tpu.dimension_semantics<parallel>], iteration_bounds = array<i64: 2>, scalar_prefetch = 0 : i64, scratch_operands = 1 : i64, tpu.core_type = #tpu.core_type<tc>, window_params = [{transform_indices = @transform_0, window_bounds = array<i64: 16, 128>}, {pipeline_mode = #tpu.pipeline_mode<synchronous>, transform_indices = @transform_1, window_bounds = array<i64: 384, 128>}, {pipeline_mode = #tpu.pipeline_mode<synchronous>, transform_indices = @transform_2, window_bounds = array<i64: 1, 128>}, {pipeline_mode = #tpu.pipeline_mode<synchronous>, transform_indices = @transform_3, window_bounds = array<i64: 1, 128>}, {transform_indices = @transform_4, window_bounds = array<i64: 16, 128>}, {transform_indices = @transform_5, window_bounds = array<i64: 1, 2, 128>}]} {
    %c0 = arith.constant 0 : index
    %c0_0 = arith.constant 0 : index
    %0 = vector.load %arg1[%c0, %c0_0] : memref<16x128xf32, #tpu.memory_space<vmem>>, vector<16x128xf32>
    %c0_1 = arith.constant 0 : index
    %c0_2 = arith.constant 0 : index
    %1 = vector.load %arg3[%c0_1, %c0_2] : memref<1x128xf32, #tpu.memory_space<vmem>>, vector<1x128xf32>
    %2 = vector.broadcast %1 : vector<1x128xf32> to vector<16x128xf32>
    %3 = arith.mulf %0, %2 : vector<16x128xf32>
    %c0_3 = arith.constant 0 : index
    %c0_4 = arith.constant 0 : index
    %4 = vector.load %arg4[%c0_3, %c0_4] : memref<1x128xf32, #tpu.memory_space<vmem>>, vector<1x128xf32>
    %5 = vector.broadcast %4 : vector<1x128xf32> to vector<16x128xf32>
    %6 = arith.addf %3, %5 : vector<16x128xf32>
    %cst = arith.constant 0.000000e+00 : f32
    %7 = vector.broadcast %cst : f32 to vector<16x128xf32>
    %8 = arith.maximumf %6, %7 : vector<16x128xf32>
    %cst_5 = arith.constant 0.000000e+00 : f32
    %9 = vector.broadcast %cst_5 : f32 to vector<1x128xf32>
    %c0_6 = arith.constant 0 : index
    %c128 = arith.constant 128 : index
    %10 = vector.load %arg7[%c0_6, %c128] : memref<16x384xf32, #tpu.memory_space<vmem>>, vector<16x128xf32>
    tpu.vector_store %arg7[%c0_6, %c128], %8 {strides = array<i32>} : memref<16x384xf32, #tpu.memory_space<vmem>>, vector<16x128xf32>,
    %11 = vector.extract_strided_slice %8 {offsets = [0, 0], sizes = [15, 128], strides = [1, 1]} : vector<16x128xf32> to vector<15x128xf32>
    %c1 = arith.constant 1 : index
    %c0_7 = arith.constant 0 : index
    %12 = vector.load %arg7[%c1, %c0_7] : memref<16x384xf32, #tpu.memory_space<vmem>>, vector<15x128xf32>
    tpu.vector_store %arg7[%c1, %c0_7], %11 {strides = array<i32>} : memref<16x384xf32, #tpu.memory_space<vmem>>, vector<15x128xf32>,
    %13 = vector.extract_strided_slice %8 {offsets = [1, 0], sizes = [15, 128], strides = [1, 1]} : vector<16x128xf32> to vector<15x128xf32>
    %c0_8 = arith.constant 0 : index
    %c256 = arith.constant 256 : index
    %14 = vector.load %arg7[%c0_8, %c256] : memref<16x384xf32, #tpu.memory_space<vmem>>, vector<15x128xf32>
    tpu.vector_store %arg7[%c0_8, %c256], %13 {strides = array<i32>} : memref<16x384xf32, #tpu.memory_space<vmem>>, vector<15x128xf32>,
    %c0_9 = arith.constant 0 : index
    %c0_10 = arith.constant 0 : index
    %15 = vector.load %arg7[%c0_9, %c0_10] : memref<16x384xf32, #tpu.memory_space<vmem>>, vector<1x128xf32>
    tpu.vector_store %arg7[%c0_9, %c0_10], %9 {strides = array<i32>} : memref<16x384xf32, #tpu.memory_space<vmem>>, vector<1x128xf32>,
    %c15 = arith.constant 15 : index
    %c256_11 = arith.constant 256 : index
    %16 = vector.load %arg7[%c15, %c256_11] : memref<16x384xf32, #tpu.memory_space<vmem>>, vector<1x128xf32>
    tpu.vector_store %arg7[%c15, %c256_11], %9 {strides = array<i32>} : memref<16x384xf32, #tpu.memory_space<vmem>>, vector<1x128xf32>,
    %c0_12 = arith.constant 0 : index
    %c0_13 = arith.constant 0 : index
    %17 = vector.load %arg7[%c0_12, %c0_13] : memref<16x384xf32, #tpu.memory_space<vmem>>, vector<16x384xf32>
    %18 = arith.truncf %17 : vector<16x384xf32> to vector<16x384xbf16>
    %c0_14 = arith.constant 0 : index
    %c0_15 = arith.constant 0 : index
    %19 = vector.load %arg2[%c0_14, %c0_15] : memref<384x128xbf16, #tpu.memory_space<vmem>>, vector<384x128xbf16>
    %cst_16 = arith.constant dense<0.000000e+00> : vector<16x128xf32>
    %20 = tpu.matmul %18, %19, %cst_16 {dimension_numbers = #tpu.dot_dimension_numbers<[1], [0], [0], [1], [0, 0, 1, 1], [], []>} : vector<16x384xbf16>, vector<384x128xbf16>, vector<16x128xf32> -> vector<16x128xf32>
    %c0_17 = arith.constant 0 : index
    %c0_18 = arith.constant 0 : index
    %21 = vector.load %arg5[%c0_17, %c0_18] : memref<16x128xf32, #tpu.memory_space<vmem>>, vector<16x128xf32>
    tpu.vector_store %arg5[%c0_17, %c0_18], %20 {strides = array<i32>} : memref<16x128xf32, #tpu.memory_space<vmem>>, vector<16x128xf32>,
    %cst_19 = arith.constant dense<0.000000e+00> : vector<128xf32>
    %22 = vector.multi_reduction <add>, %20, %cst_19 [0] : vector<16x128xf32> to vector<128xf32>
    %23 = vector.shape_cast %22 : vector<128xf32> to vector<1x128xf32>
    %cst_20 = arith.constant 1.600000e+01 : f32
    %24 = vector.broadcast %cst_20 : f32 to vector<1x128xf32>
    %25 = arith.divf %23, %24 : vector<1x128xf32>
    %26 = vector.broadcast %25 : vector<1x128xf32> to vector<16x128xf32>
    %27 = arith.subf %20, %26 : vector<16x128xf32>
    %c0_21 = arith.constant 0 : index
    %c0_22 = arith.constant 0 : index
    %c0_23 = arith.constant 0 : index
    %28 = vector.load %arg6[%c0_21, %c0_22, %c0_23] : memref<1x2x128xf32, #tpu.memory_space<vmem>>, vector<1x1x128xf32>
    %29 = vector.shape_cast %28 : vector<1x1x128xf32> to vector<1x128xf32>
    %30 = vector.shape_cast %25 : vector<1x128xf32> to vector<1x1x128xf32>
    tpu.vector_store %arg6[%c0_21, %c0_22, %c0_23], %30 {strides = array<i32>} : memref<1x2x128xf32, #tpu.memory_space<vmem>>, vector<1x1x128xf32>,
    %31 = arith.mulf %27, %27 : vector<16x128xf32>
    %cst_24 = arith.constant dense<0.000000e+00> : vector<128xf32>
    %32 = vector.multi_reduction <add>, %31, %cst_24 [0] : vector<16x128xf32> to vector<128xf32>
    %33 = vector.shape_cast %32 : vector<128xf32> to vector<1x128xf32>
    %c0_25 = arith.constant 0 : index
    %c1_26 = arith.constant 1 : index
    %c0_27 = arith.constant 0 : index
    %34 = vector.load %arg6[%c0_25, %c1_26, %c0_27] : memref<1x2x128xf32, #tpu.memory_space<vmem>>, vector<1x1x128xf32>
    %35 = vector.shape_cast %34 : vector<1x1x128xf32> to vector<1x128xf32>
    %36 = vector.shape_cast %33 : vector<1x128xf32> to vector<1x1x128xf32>
    tpu.vector_store %arg6[%c0_25, %c1_26, %c0_27], %36 {strides = array<i32>} : memref<1x2x128xf32, #tpu.memory_space<vmem>>, vector<1x1x128xf32>,
    return
  }
  func.func @transform_0(%arg0: i32) -> (i32, i32) {
    %c0_i32 = arith.constant 0 : i32
    %c0_i32_0 = arith.constant 0 : i32
    return %arg0, %c0_i32 : i32, i32
  }
  func.func @transform_1(%arg0: i32) -> (i32, i32) {
    %c0_i32 = arith.constant 0 : i32
    %c0_i32_0 = arith.constant 0 : i32
    %c0_i32_1 = arith.constant 0 : i32
    return %c0_i32, %c0_i32_0 : i32, i32
  }
  func.func @transform_2(%arg0: i32) -> (i32, i32) {
    %c0_i32 = arith.constant 0 : i32
    %c0_i32_0 = arith.constant 0 : i32
    %c0_i32_1 = arith.constant 0 : i32
    return %c0_i32, %c0_i32_0 : i32, i32
  }
  func.func @transform_3(%arg0: i32) -> (i32, i32) {
    %c0_i32 = arith.constant 0 : i32
    %c0_i32_0 = arith.constant 0 : i32
    %c0_i32_1 = arith.constant 0 : i32
    return %c0_i32, %c0_i32_0 : i32, i32
  }
  func.func @transform_4(%arg0: i32) -> (i32, i32) {
    %c0_i32 = arith.constant 0 : i32
    %c0_i32_0 = arith.constant 0 : i32
    return %arg0, %c0_i32 : i32, i32
  }
  func.func @transform_5(%arg0: i32) -> (i32, i32, i32) {
    %c0_i32 = arith.constant 0 : i32
    %c0_i32_0 = arith.constant 0 : i32
    %c0_i32_1 = arith.constant 0 : i32
    return %arg0, %c0_i32, %c0_i32_0 : i32, i32, i32
  }
}

</mosaic_0001>

<llo_original>
// kernel: tile.19
$region0: #{tile.19}
  %s0 = inlined_call_operand.vmem [shape: f32[16,8], index: 0, kind: input, shape index: {}]
  %s1 = inlined_call_operand.vmem [shape: f32[1,128], index: 1, kind: output, shape index: {}]
  $region1: #{tile.19} parent=0
    #allocation0 [shape = 'u8[4096]{0}', space=vmem, size = 0x1000, scoped, tag = 'scoped mem for output reshape']
    %v2 = vld [vmem:[%s0] sm:$0x1]
    %vm3 = vcmask 64512
    %4 = vst.msk [vmem:[#allocation0] sm:$0x1] %vm3, %v2
    %s5 = scalar_lea.vmem %s0, 15
    %v6 = vld [vmem:[%s5] sm:$0x1]
    %7 = vrot.lane.b32.xlu0 %v6, 120
    %v8 = vpop.permute.xlu0 %7
    %vm9 = vcmask 1048512
    %10 = vst.msk [vmem:[#allocation0] sm:$0x1] %vm9, %v8
    %s11 = scalar_lea.vmem %s0, 14
    %v12 = vld [vmem:[%s11] sm:$0x1]
    %13 = vrot.lane.b32.xlu0 %v12, 112
    %v14 = vpop.permute.xlu0 %13
    %vm15 = vcmask 982912
    %16 = vst.msk [vmem:[#allocation0] sm:$0x1] %vm15, %v14
    %s17 = scalar_lea.vmem %s0, 13
    %v18 = vld [vmem:[%s17] sm:$0x1]
    %19 = vrot.lane.b32.xlu0 %v18, 104
    %v20 = vpop.permute.xlu0 %19
    %vm21 = vcmask 917312
    %22 = vst.msk [vmem:[#allocation0] sm:$0x1] %vm21, %v20
    %s23 = scalar_lea.vmem %s0, 12
    %v24 = vld [vmem:[%s23] sm:$0x1]
    %25 = vrot.lane.b32.xlu0 %v24, 96
    %v26 = vpop.permute.xlu0 %25
    %vm27 = vcmask 851712
    %28 = vst.msk [vmem:[#allocation0] sm:$0x1] %vm27, %v26
    %s29 = scalar_lea.vmem %s0, 11
    %v30 = vld [vmem:[%s29] sm:$0x1]
    %31 = vrot.lane.b32.xlu0 %v30, 88
    %v32 = vpop.permute.xlu0 %31
    %vm33 = vcmask 786112
    %34 = vst.msk [vmem:[#allocation0] sm:$0x1] %vm33, %v32
    %s35 = scalar_lea.vmem %s0, 10
    %v36 = vld [vmem:[%s35] sm:$0x1]
    %37 = vrot.lane.b32.xlu0 %v36, 80
    %v38 = vpop.permute.xlu0 %37
    %vm39 = vcmask 720512
    %40 = vst.msk [vmem:[#allocation0] sm:$0x1] %vm39, %v38
    %s41 = scalar_lea.vmem %s0, 9
    %v42 = vld [vmem:[%s41] sm:$0x1]
    %43 = vrot.lane.b32.xlu0 %v42, 72
    %v44 = vpop.permute.xlu0 %43
    %vm45 = vcmask 654912
    %46 = vst.msk [vmem:[#allocation0] sm:$0x1] %vm45, %v44
    %s47 = scalar_lea.vmem %s0, 8
    %v48 = vld [vmem:[%s47] sm:$0x1]
    %49 = vrot.lane.b32.xlu0 %v48, 64
    %v50 = vpop.permute.xlu0 %49
    %vm51 = vcmask 589312
    %52 = vst.msk [vmem:[#allocation0] sm:$0x1] %vm51, %v50
    %s53 = scalar_lea.vmem %s0, 7
    %v54 = vld [vmem:[%s53] sm:$0x1]
    %55 = vrot.lane.b32.xlu0 %v54, 56
    %v56 = vpop.permute.xlu0 %55
    %vm57 = vcmask 523712
    %58 = vst.msk [vmem:[#allocation0] sm:$0x1] %vm57, %v56
    %s59 = scalar_lea.vmem %s0, 6
    %v60 = vld [vmem:[%s59] sm:$0x1]
    %61 = vrot.lane.b32.xlu0 %v60, 48
    %v62 = vpop.permute.xlu0 %61
    %vm63 = vcmask 458112
    %64 = vst.msk [vmem:[#allocation0] sm:$0x1] %vm63, %v62
    %s65 = scalar_lea.vmem %s0, 5
    %v66 = vld [vmem:[%s65] sm:$0x1]
    %67 = vrot.lane.b32.xlu0 %v66, 40
    %v68 = vpop.permute.xlu0 %67
    %vm69 = vcmask 392512
    %70 = vst.msk [vmem:[#allocation0] sm:$0x1] %vm69, %v68
    %s71 = scalar_lea.vmem %s0, 4
    %v72 = vld [vmem:[%s71] sm:$0x1]
    %73 = vrot.lane.b32.xlu0 %v72, 32
    %v74 = vpop.permute.xlu0 %73
    %vm75 = vcmask 326912
    %76 = vst.msk [vmem:[#allocation0] sm:$0x1] %vm75, %v74
    %s77 = scalar_lea.vmem %s0, 3
    %v78 = vld [vmem:[%s77] sm:$0x1]
    %79 = vrot.lane.b32.xlu0 %v78, 24
    %v80 = vpop.permute.xlu0 %79
    %vm81 = vcmask 261312
    %82 = vst.msk [vmem:[#allocation0] sm:$0x1] %vm81, %v80
    %s83 = scalar_lea.vmem %s0, 2
    %v84 = vld [vmem:[%s83] sm:$0x1]
    %85 = vrot.lane.b32.xlu0 %v84, 16
    %v86 = vpop.permute.xlu0 %85
    %vm87 = vcmask 195712
    %88 = vst.msk [vmem:[#allocation0] sm:$0x1] %vm87, %v86
    %s89 = scalar_lea.vmem %s0, 1
    %v90 = vld [vmem:[%s89] sm:$0x1]
    %91 = vrot.lane.b32.xlu0 %v90, 8
    %v92 = vpop.permute.xlu0 %91
    %vm93 = vcmask 130112
    %94 = vst.msk [vmem:[#allocation0] sm:$0x1] %vm93, %v92
    %s96 = sshllo.u32 0, 1
    %v98 = vld [vmem:[#allocation0] sm:%s96]
    %s99 = sshllo.u32 0, 1
    %100 = vst [vmem:[%s1] sm:%s99] %v98

// kernel: double_conv.2
$region0: #{double_conv.2}
  #allocation0 [shape = 'u32[]', space=smem, size = 0x4, offset = 0x4, fixed_abs, tag = 'smem constant byte address 0x4 - core index']
  #allocation1 [shape = 'u32[144,128]{1,0:T(1,128)}', space=vmem, size = 0x12000, scoped, tag = 'internal scratch']
  #allocation2 [shape = 'f32[16,384]{1,0:T(8,128)}', space=vmem, size = 0x6000, scoped, tag = 'scratch operand']
  %s0 = inlined_call_operand.vmem [shape: f32[32,128], index: 0, kind: input, shape index: {}]
  %s1 = inlined_call_operand.vmem [shape: bf16[384,128], index: 1, kind: input, shape index: {}]
  %s2 = inlined_call_operand.vmem [shape: f32[32,128], index: 2, kind: output, shape index: {0}]
  %s3 = inlined_call_operand.vmem [shape: f32[2,2,128], index: 3, kind: output, shape index: {1}]
  %4 = xla_tuple %s2, %s3
  %s5 = sld [smem:[#allocation0]]
  $region49: #{double_conv.2} parent=0
    _
  %s7 = ssub.s32 1, %s5
  %s8 = scalar_select 0, %s7, %s5
  loop: start=0, step=1, limit=4
  $region2: #{double_conv.2} parent=0 // loop_pre_header
    _
  $region3: #{double_conv.2} parent=0 // loop_header
    %s10 = sphi 0, %s14
    %p11 = scmp.ge.s32.totalorder %s10, 4
    %s20 = sphi 0, %s22
    %s23 = sphi 0, %s20
    %s24 = sphi 0, %s23
    %s40 = sphi 0, %s24
    %s44 = sphi 0, %s44
    %s46 = sphi 0, %s44
    %s47 = sphi 0, %s46
    %s61 = sphi 0, %s47
    %s67 = sphi 0, %s69
    %s70 = sphi 0, %s67
    %s71 = sphi 0, %s70
    %s87 = sphi 0, %s71
    %s93 = sphi 0, %s95
    %s96 = sphi 0, %s93
    %s97 = sphi 0, %s96
    %s113 = sphi 0, %s97
  $region4: #{double_conv.2} parent=0 // loop_header_branch
    %13 = sbr.rel (%p11) target = $region8
  $region5: #{double_conv.2} parent=0 // loop_body
    %s15 = ssub.s32 %s10, 1
    %s16 = ssub.s32 %s10, 2
    %s17 = sadd.s32 %s10, 1
    %s18 = ssub.s32 %s10, %s17
    %p19 = scmp.eq.s32.totalorder %s18, 0
    %s21 = sadd.s32 %s20, 1
    %s22 = scalar_select %p19, %s20, %s21
    %p25 = pneg %p19
    %p26 = scmp.eq.s32.totalorder %s10, 1
    %p27 = por %p25, %p26
    %p28 = scmp.ne.s32.totalorder %s20, %s23
    %p29 = scmp.eq.s32.totalorder %s10, 0
    %p30 = por %p28, %p29
    %p31 = scmp.ne.s32.totalorder %s20, %s23
    %p32 = scmp.eq.s32.totalorder %s15, 1
    %p33 = por %p31, %p32
    %p34 = scmp.ne.s32.totalorder %s23, %s24
    %p35 = scmp.eq.s32.totalorder %s15, 0
    %p36 = por %p34, %p35
    %p37 = scmp.ne.s32.totalorder %s23, %s24
    %p38 = scmp.eq.s32.totalorder %s16, 1
    %p39 = por %p37, %p38
    %p41 = scmp.ne.s32.totalorder %s24, %s40
    %p42 = scmp.eq.s32.totalorder %s16, 0
    %p43 = por %p41, %p42
    %s45 = sadd.s32 %s44, 1
    %p48 = scmp.eq.s32.totalorder %s10, 1
    %p49 = scmp.ne.s32.totalorder %s44, %s46
    %p50 = scmp.eq.s32.totalorder %s10, 0
    %p51 = por %p49, %p50
    %p52 = scmp.ne.s32.totalorder %s44, %s46
    %p53 = scmp.eq.s32.totalorder %s15, 1
    %p54 = por %p52, %p53
    %p55 = scmp.ne.s32.totalorder %s46, %s47
    %p56 = scmp.eq.s32.totalorder %s15, 0
    %p57 = por %p55, %p56
    %p58 = scmp.ne.s32.totalorder %s46, %s47
    %p59 = scmp.eq.s32.totalorder %s16, 1
    %p60 = por %p58, %p59
    %p62 = scmp.ne.s32.totalorder %s47, %s61
    %p63 = scmp.eq.s32.totalorder %s16, 0
    %p64 = por %p62, %p63
    %s65 = ssub.s32 %s10, %s17
    %p66 = scmp.eq.s32.totalorder %s65, 0
    %s68 = sadd.s32 %s67, 1
    %s69 = scalar_select %p66, %s67, %s68
    %p72 = pneg %p66
    %p73 = scmp.eq.s32.totalorder %s10, 1
    %p74 = por %p72, %p73
    %p75 = scmp.ne.s32.totalorder %s67, %s70
    %p76 = scmp.eq.s32.totalorder %s10, 0
    %p77 = por %p75, %p76
    %p78 = scmp.ne.s32.totalorder %s67, %s70
    %p79 = scmp.eq.s32.totalorder %s15, 1
    %p80 = por %p78, %p79
    %p81 = scmp.ne.s32.totalorder %s70, %s71
    %p82 = scmp.eq.s32.totalorder %s15, 0
    %p83 = por %p81, %p82
    %p84 = scmp.ne.s32.totalorder %s70, %s71
    %p85 = scmp.eq.s32.totalorder %s16, 1
    %p86 = por %p84, %p85
    %p88 = scmp.ne.s32.totalorder %s71, %s87
    %p89 = scmp.eq.s32.totalorder %s16, 0
    %p90 = por %p88, %p89
    %s91 = ssub.s32 %s10, %s17
    %p92 = scmp.eq.s32.totalorder %s91, 0
    %s94 = sadd.s32 %s93, 1
    %s95 = scalar_select %p92, %s93, %s94
    %p98 = pneg %p92
    %p99 = scmp.eq.s32.totalorder %s10, 1
    %p100 = por %p98, %p99
    %p101 = scmp.ne.s32.totalorder %s93, %s96
    %p102 = scmp.eq.s32.totalorder %s10, 0
    %p103 = por %p101, %p102
    %p104 = scmp.ne.s32.totalorder %s93, %s96
    %p105 = scmp.eq.s32.totalorder %s15, 1
    %p106 = por %p104, %p105
    %p107 = scmp.ne.s32.totalorder %s96, %s97
    %p108 = scmp.eq.s32.totalorder %s15, 0
    %p109 = por %p107, %p108
    %p110 = scmp.ne.s32.totalorder %s96, %s97
    %p111 = scmp.eq.s32.totalorder %s16, 1
    %p112 = por %p110, %p111
    %p114 = scmp.ne.s32.totalorder %s97, %s113
    %p115 = scmp.eq.s32.totalorder %s16, 0
    %p116 = por %p114, %p115
    %p117 = scmp.le.s32.totalorder 1, %s10
    %p118 = scmp.lt.s32.totalorder %s10, 3
    %p119 = pnand %p117, %p118
    %p120 = pneg %p119
    // Predicated region
    $region9: #{double_conv.2} parent=5 // pred_check
      _
    $region10: #{double_conv.2} parent=5 // pred_check_branch
      %122 = sbr.rel (%p119) target = $region12
    $region11: #{double_conv.2} parent=5 // pred_region
      %s123 = ssub.s32 %s10, 1
      // Predicated region
      $region13: #{double_conv.2} parent=11 // pred_check
        %p124 = pneg %p57
      $region14: #{double_conv.2} parent=11 // pred_check_branch
        %126 = sbr.rel (%p124) target = $region16
      $region15: #{double_conv.2} parent=11 // pred_region
        _
      $region16: #{double_conv.2} parent=11 // pred_fallthru
        _
    $region12: #{double_conv.2} parent=5 // pred_fallthru
      _
    %p127 = scmp.lt.s32.totalorder %s10, 2
    // Predicated region
    $region17: #{double_conv.2} parent=5 // pred_check
      %p128 = pneg %p127
    $region18: #{double_conv.2} parent=5 // pred_check_branch
      %130 = sbr.rel (%p128) target = $region20
    $region19: #{double_conv.2} parent=5 // pred_region
      // Predicated region
      $region21: #{double_conv.2} parent=19 // pred_check
        %p131 = pneg %p30
      $region22: #{double_conv.2} parent=19 // pred_check_branch
        %133 = sbr.rel (%p131) target = $region24
      $region23: #{double_conv.2} parent=19 // pred_region
        %s134 = smul.u32 2, %s10
        %p135 = scmp.lt.s32.totalorder %s134, 3
        %s136 = scalar_select %p135, %s134, 3
        %s137 = smul.addr %s136, 8
        %s138 = scalar_lea.vmem %s0, %s137
        %s139 = smul.u32 2, %s10
      $region24: #{double_conv.2} parent=19 // pred_fallthru
        _
    $region20: #{double_conv.2} parent=5 // pred_fallthru
      _
    %p140 = scmp.le.s32.totalorder 1, %s10
    %p141 = scmp.lt.s32.totalorder %s10, 3
    %p142 = pnand %p140, %p141
    %p143 = pneg %p142
    // Predicated region
    $region25: #{double_conv.2} parent=5 // pred_check
      _
    $region26: #{double_conv.2} parent=5 // pred_check_branch
      %145 = sbr.rel (%p142) target = $region28
    $region27: #{double_conv.2} parent=5 // pred_region
      %s146 = ssub.s32 %s10, 1
      %s147 = smul.u32 2, %s15
      %p148 = scmp.lt.s32.totalorder %s147, 3
      %s149 = scalar_select %p148, %s147, 3
      %s150 = smul.addr %s149, 8
      %s151 = scalar_lea.vmem %s0, %s150
      %p152 = pneg %p36
      %p153 = pneg %p33
      %p154 = pneg %p57
      %p155 = pneg %p54
      %p156 = pneg %p83
      %p157 = pneg %p80
      %s158 = smul.u32 2, %s15
      %p159 = scmp.lt.s32.totalorder %s158, 3
      %s160 = scalar_select %p159, %s158, 3
      %s161 = smul.addr %s160, 8
      %s162 = scalar_lea.vmem %s2, %s161
      %p163 = pneg %p109
      %p164 = pneg %p106
      %p165 = scmp.lt.s32.totalorder %s15, 1
      %s166 = scalar_select %p165, %s15, 1
      %s167 = smul.addr %s166, 2
      %s168 = scalar_lea.vmem %s3, %s167
      %s169 = smul.u32 2, %s15
      %p170 = scmp.lt.s32.totalorder %s169, 3
      %s171 = scalar_select %p170, %s169, 3
      %s172 = smul.addr %s171, 8
      %s173 = scalar_lea.vmem %s0, %s172
      %s174 = smul.u32 2, %s15
      %s175 = smul.u32 2, %s15
      %p176 = scmp.lt.s32.totalorder %s175, 3
      %s177 = scalar_select %p176, %s175, 3
      %s178 = smul.addr %s177, 8
      %s179 = scalar_lea.vmem %s2, %s178
      %s180 = smul.u32 2, %s15
      %p181 = scmp.lt.s32.totalorder %s15, 1
      %s182 = scalar_select %p181, %s15, 1
      %s183 = smul.addr %s182, 2
      %s184 = scalar_lea.vmem %s3, %s183
      %v186 = vld [vmem:[%s173] sm:$0xff]
      %v187 = vld [vmem:[%s173 + $0x8] sm:$0xff]
      %188 = vst [vmem:[#allocation2 + $0x8] sm:$0xff] %v186
      %189 = vst [vmem:[#allocation2 + $0x20] sm:$0xff] %v187
      %vm192 = vcmask 1040384
      %v193 = vrot.slane %v186, 7
      %v194 = vrot.slane %v187, 7
      %v195 = vsel %vm192, %v193, %v194
      %198 = vst [vmem:[#allocation2] sm:$0xfe] %v193
      %199 = vst [vmem:[#allocation2 + $0x18] sm:$0xff] %v195
      %vm200 = vcmask 1046528
      %v201 = vrot.slane %v186, 1
      %v202 = vrot.slane %v187, 1
      %v203 = vsel %vm200, %v201, %v202
      %206 = vst [vmem:[#allocation2 + $0x10] sm:$0xff] %v203
      %207 = vst [vmem:[#allocation2 + $0x28] sm:$0x7f] %v202
      %208 = vst [vmem:[#allocation2] sm:$0x1] 0.0
      %209 = vst [vmem:[#allocation2 + $0x2f] sm:$0x1] 0.0
      %v210 = vld [vmem:[#allocation2] sm:$0xff]
      %v211 = vld [vmem:[#allocation2 + $0x8] sm:$0xff]
      %v212 = vld [vmem:[#allocation2 + $0x10] sm:$0xff]
      %v213 = vld [vmem:[#allocation2 + $0x18] sm:$0xff]
      %v214 = vld [vmem:[#allocation2 + $0x20] sm:$0xff]
      %v215 = vld [vmem:[#allocation2 + $0x28] sm:$0xff]
      %v216 = vpack.c.bf16 %v213, %v210
      %v217 = vpack.c.bf16 %v214, %v211
      %v218 = vpack.c.bf16 %v215, %v212
      %v219 = vld [vmem:[%s1] sm:$0xf]
      %v220 = vld [vmem:[%s1 + $0x4] sm:$0xf]
      %v221 = vld [vmem:[%s1 + $0x8] sm:$0xf]
      %v222 = vld [vmem:[%s1 + $0xc] sm:$0xf]
      %v223 = vld [vmem:[%s1 + $0x10] sm:$0xf]
      %v224 = vld [vmem:[%s1 + $0x14] sm:$0xf]
      %v225 = vld [vmem:[%s1 + $0x18] sm:$0xf]
      %v226 = vld [vmem:[%s1 + $0x1c] sm:$0xf]
      %v227 = vld [vmem:[%s1 + $0x20] sm:$0xf]
      %v228 = vld [vmem:[%s1 + $0x24] sm:$0xf]
      %v229 = vld [vmem:[%s1 + $0x28] sm:$0xf]
      %v230 = vld [vmem:[%s1 + $0x2c] sm:$0xf]
      %v231 = vld [vmem:[%s1 + $0x30] sm:$0xf]
      %v232 = vld [vmem:[%s1 + $0x34] sm:$0xf]
      %v233 = vld [vmem:[%s1 + $0x38] sm:$0xf]
      %v234 = vld [vmem:[%s1 + $0x3c] sm:$0xf]
      %v235 = vld [vmem:[%s1 + $0x40] sm:$0xf]
      %v236 = vld [vmem:[%s1 + $0x44] sm:$0xf]
      %v237 = vld [vmem:[%s1 + $0x48] sm:$0xf]
      %v238 = vld [vmem:[%s1 + $0x4c] sm:$0xf]
      %v239 = vld [vmem:[%s1 + $0x50] sm:$0xf]
      %v240 = vld [vmem:[%s1 + $0x54] sm:$0xf]
      %v241 = vld [vmem:[%s1 + $0x58] sm:$0xf]
      %v242 = vld [vmem:[%s1 + $0x5c] sm:$0xf]
      %v243 = vld [vmem:[%s1 + $0x60] sm:$0xf]
      %v244 = vld [vmem:[%s1 + $0x64] sm:$0xf]
      %v245 = vld [vmem:[%s1 + $0x68] sm:$0xf]
      %v246 = vld [vmem:[%s1 + $0x6c] sm:$0xf]
      %v247 = vld [vmem:[%s1 + $0x70] sm:$0xf]
      %v248 = vld [vmem:[%s1 + $0x74] sm:$0xf]
      %v249 = vld [vmem:[%s1 + $0x78] sm:$0xf]
      %v250 = vld [vmem:[%s1 + $0x7c] sm:$0xf]
      %v251 = vld [vmem:[%s1 + $0x80] sm:$0xf]
      %v252 = vld [vmem:[%s1 + $0x84] sm:$0xf]
      %v253 = vld [vmem:[%s1 + $0x88] sm:$0xf]
      %v254 = vld [vmem:[%s1 + $0x8c] sm:$0xf]
      %v255 = vld [vmem:[%s1 + $0x90] sm:$0xf]
      %v256 = vld [vmem:[%s1 + $0x94] sm:$0xf]
      %v257 = vld [vmem:[%s1 + $0x98] sm:$0xf]
      %v258 = vld [vmem:[%s1 + $0x9c] sm:$0xf]
      %v259 = vld [vmem:[%s1 + $0xa0] sm:$0xf]
      %v260 = vld [vmem:[%s1 + $0xa4] sm:$0xf]
      %v261 = vld [vmem:[%s1 + $0xa8] sm:$0xf]
      %v262 = vld [vmem:[%s1 + $0xac] sm:$0xf]
      %v263 = vld [vmem:[%s1 + $0xb0] sm:$0xf]
      %v264 = vld [vmem:[%s1 + $0xb4] sm:$0xf]
      %v265 = vld [vmem:[%s1 + $0xb8] sm:$0xf]
      %v266 = vld [vmem:[%s1 + $0xbc] sm:$0xf]
      %v315 = vunpack.c.l.b16 %v219
      %v316 = vunpack.c.l.b16 %v220
      %v317 = vunpack.c.l.b16 %v221
      %v318 = vunpack.c.l.b16 %v222
      %v319 = vunpack.c.l.b16 %v223
      %v320 = vunpack.c.l.b16 %v224
      %v321 = vunpack.c.l.b16 %v225
      %v322 = vunpack.c.l.b16 %v226
      %v323 = vunpack.c.l.b16 %v227
      %v324 = vunpack.c.l.b16 %v228
      %v325 = vunpack.c.l.b16 %v229
      %v326 = vunpack.c.l.b16 %v230
      %v327 = vunpack.c.l.b16 %v231
      %v328 = vunpack.c.l.b16 %v232
      %v329 = vunpack.c.l.b16 %v233
      %v330 = vunpack.c.l.b16 %v234
      %v331 = vunpack.c.l.b16 %v235
      %v332 = vunpack.c.l.b16 %v236
      %v333 = vunpack.c.l.b16 %v237
      %v334 = vunpack.c.l.b16 %v238
      %v335 = vunpack.c.l.b16 %v239
      %v336 = vunpack.c.l.b16 %v240
      %v337 = vunpack.c.l.b16 %v241
      %v338 = vunpack.c.l.b16 %v242
      %v339 = vunpack.c.l.b16 %v243
      %v340 = vunpack.c.l.b16 %v244
      %v341 = vunpack.c.l.b16 %v245
      %v342 = vunpack.c.l.b16 %v246
      %v343 = vunpack.c.l.b16 %v247
      %v344 = vunpack.c.l.b16 %v248
      %v345 = vunpack.c.l.b16 %v249
      %v346 = vunpack.c.l.b16 %v250
      %v347 = vunpack.c.l.b16 %v251
      %v348 = vunpack.c.l.b16 %v252
      %v349 = vunpack.c.l.b16 %v253
      %v350 = vunpack.c.l.b16 %v254
      %v351 = vunpack.c.l.b16 %v255
      %v352 = vunpack.c.l.b16 %v256
      %v353 = vunpack.c.l.b16 %v257
      %v354 = vunpack.c.l.b16 %v258
      %v355 = vunpack.c.l.b16 %v259
      %v356 = vunpack.c.l.b16 %v260
      %v357 = vunpack.c.l.b16 %v261
      %v358 = vunpack.c.l.b16 %v262
      %v359 = vunpack.c.l.b16 %v263
      %v360 = vunpack.c.l.b16 %v264
      %v361 = vunpack.c.l.b16 %v265
      %v362 = vunpack.c.l.b16 %v266
      %v363 = vpack.c.b16 %v316, %v315
      %v364 = vpack.c.b16 %v318, %v317
      %v365 = vpack.c.b16 %v320, %v319
      %v366 = vpack.c.b16 %v322, %v321
      %v367 = vpack.c.b16 %v324, %v323
      %v368 = vpack.c.b16 %v326, %v325
      %v369 = vpack.c.b16 %v328, %v327
      %v370 = vpack.c.b16 %v330, %v329
      %v371 = vpack.c.b16 %v332, %v331
      %v372 = vpack.c.b16 %v334, %v333
      %v373 = vpack.c.b16 %v336, %v335
      %v374 = vpack.c.b16 %v338, %v337
      %v375 = vpack.c.b16 %v340, %v339
      %v376 = vpack.c.b16 %v342, %v341
      %v377 = vpack.c.b16 %v344, %v343
      %v378 = vpack.c.b16 %v346, %v345
      %v379 = vpack.c.b16 %v348, %v347
      %v380 = vpack.c.b16 %v350, %v349
      %v381 = vpack.c.b16 %v352, %v351
      %v382 = vpack.c.b16 %v354, %v353
      %v383 = vpack.c.b16 %v356, %v355
      %v384 = vpack.c.b16 %v358, %v357
      %v385 = vpack.c.b16 %v360, %v359
      %v386 = vpack.c.b16 %v362, %v361
      %411 = vmatprep.subr.bf16.mxu0 0
      %412 = vmatpush1.bf16.msra.mxu0 %v363
      %413 = vmatprep.subr.bf16.mxu0 0
      %414 = vmatpush1.bf16.msra.mxu0 %v364
      %415 = vmatprep.subr.bf16.mxu0 0
      %416 = vmatpush1.bf16.msra.mxu0 %v365
      %417 = vmatprep.subr.bf16.mxu0 0
      %418 = vmatpush1.bf16.msra.mxu0 %v366
      %419 = vmatprep.subr.bf16.mxu0 0
      %420 = vmatpush1.bf16.msra.mxu0 %v367
      %421 = vmatprep.subr.bf16.mxu0 0
      %422 = vmatpush1.bf16.msra.mxu0 %v368
      %423 = vmatprep.subr.bf16.mxu0 0
      %424 = vmatpush1.bf16.msra.mxu0 %v369
      %425 = vmatprep.subr.bf16.mxu0 0
      %426 = vmatpush1.bf16.msra.mxu0 %v370
      %427 = vmatprep.subr.bf16.mxu0 0
      %428 = vmatpush1.bf16.msra.mxu0 %v371
      %429 = vmatprep.subr.bf16.mxu0 0
      %430 = vmatpush1.bf16.msra.mxu0 %v372
      %431 = vmatprep.subr.bf16.mxu0 0
      %432 = vmatpush1.bf16.msra.mxu0 %v373
      %433 = vmatprep.subr.bf16.mxu0 0
      %434 = vmatpush1.bf16.msra.mxu0 %v374
      %435 = vmatprep.subr.bf16.mxu0 0
      %436 = vmatpush1.bf16.msra.mxu0 %v375
      %437 = vmatprep.subr.bf16.mxu0 0
      %438 = vmatpush1.bf16.msra.mxu0 %v376
      %439 = vmatprep.subr.bf16.mxu0 0
      %440 = vmatpush1.bf16.msra.mxu0 %v377
      %441 = vmatprep.subr.bf16.mxu0 0
      %442 = vmatpush1.bf16.msra.mxu0 %v378
      %443 = vmatprep.mubr.bf16.mxu0 %v217
      %444 = vmatmul.mubr.bf16.gmra.mrb[0].mxu0 %v216
      %v445 = vpop.f32.mrb[0].mxu0
      %v446 = vadd.f32 0.0, %v445
      %v447 = vpop.f32.mrb[0].mxu0
      %v448 = vpop.f32.mrb[0].mxu0
      %v449 = vadd.f32 0.0, %v448
      %v450 = vpop.f32.mrb[0].mxu0
      %451 = vdwg.mxu0
      %452 = vmatprep.subr.bf16.mxu0 0
      %453 = vmatpush1.bf16.msra.mxu0 %v379
      %454 = vmatprep.subr.bf16.mxu0 0
      %455 = vmatpush1.bf16.msra.mxu0 %v380
      %456 = vmatprep.subr.bf16.mxu0 0
      %457 = vmatpush1.bf16.msra.mxu0 %v381
      %458 = vmatprep.subr.bf16.mxu0 0
      %459 = vmatpush1.bf16.msra.mxu0 %v382
      %460 = vmatprep.subr.bf16.mxu0 0
      %461 = vmatpush1.bf16.msra.mxu0 %v383
      %462 = vmatprep.subr.bf16.mxu0 0
      %463 = vmatpush1.bf16.msra.mxu0 %v384
      %464 = vmatprep.subr.bf16.mxu0 0
      %465 = vmatpush1.bf16.msra.mxu0 %v385
      %466 = vmatprep.subr.bf16.mxu0 0
      %467 = vmatpush1.bf16.msra.mxu0 %v386
      %468 = vmatprep.subr.bf16.mxu0 0
      %469 = vmatpush1.bf16.msra.mxu0 0
      %470 = vmatprep.subr.bf16.mxu0 0
      %471 = vmatpush1.bf16.msra.mxu0 0
      %472 = vmatprep.subr.bf16.mxu0 0
      %473 = vmatpush1.bf16.msra.mxu0 0
      %474 = vmatprep.subr.bf16.mxu0 0
      %475 = vmatpush1.bf16.msra.mxu0 0
      %476 = vmatprep.subr.bf16.mxu0 0
      %477 = vmatpush1.bf16.msra.mxu0 0
      %478 = vmatprep.subr.bf16.mxu0 0
      %479 = vmatpush1.bf16.msra.mxu0 0
      %480 = vmatprep.subr.bf16.mxu0 0
      %481 = vmatpush1.bf16.msra.mxu0 0
      %482 = vmatprep.subr.bf16.mxu0 0
      %483 = vmatpush1.bf16.msra.mxu0 0
      %484 = vmatprep.mubr.bf16.mxu0 0
      %485 = vmatmul.mubr.bf16.gmra.mrb[0].mxu0 %v218
      %v486 = vpop.f32.mrb[0].mxu0
      %v487 = vadd.f32 %v446, %v486
      %v488 = vpop.f32.mrb[0].mxu0
      %v489 = vpop.f32.mrb[0].mxu0
      %v490 = vadd.f32 %v449, %v489
      %v491 = vpop.f32.mrb[0].mxu0
      %492 = vdwg.mxu0
      %493 = vst [vmem:[%s179] sm:$0xff] %v487
      %494 = vst [vmem:[%s179 + $0x8] sm:$0xff] %v490
      %v495 = vadd.f32 %v487, %v490
      %v496 = vrot.slane %v495, 4
      %v497 = vadd.f32 %v495, %v496
      %v498 = vrot.slane %v497, 2
      %v499 = vadd.f32 %v497, %v498
      %v500 = vrot.slane %v499, 1
      %v501 = vadd.f32 %v499, %v500
      %v502 = vrcp.pop 16.0
      %v503 = vmul.f32 %v501, %v502
      %v504 = vsub.f32 %v487, %v503
      %v505 = vsub.f32 %v490, %v503
      %506 = vst [vmem:[%s184] sm:$0x1] %v503
      %v507 = vmul.f32 %v504, %v504
      %v508 = vmul.f32 %v505, %v505
      %v509 = vadd.f32 %v507, %v508
      %v510 = vrot.slane %v509, 4
      %v511 = vadd.f32 %v509, %v510
      %v512 = vrot.slane %v511, 2
      %v513 = vadd.f32 %v511, %v512
      %v514 = vrot.slane %v513, 1
      %v515 = vadd.f32 %v513, %v514
      %516 = vst [vmem:[%s184 + $0x1] sm:$0x1] %v515
      %s517 = smul.u32 2, %s15
      %p518 = scmp.lt.s32.totalorder %s517, 3
      %s519 = scalar_select %p518, %s517, 3
      %s520 = smul.addr %s519, 8
      %s521 = scalar_lea.vmem %s2, %s520
      %p522 = scmp.lt.s32.totalorder %s15, 1
      %s523 = scalar_select %p522, %s15, 1
      %s524 = smul.addr %s523, 2
      %s525 = scalar_lea.vmem %s3, %s524
      // Predicated region
      $region29: #{double_conv.2} parent=27 // pred_check
        %p526 = pneg %p80
      $region30: #{double_conv.2} parent=27 // pred_check_branch
        %528 = sbr.rel (%p526) target = $region32
      $region31: #{double_conv.2} parent=27 // pred_region
        %s529 = smul.u32 2, %s15
      $region32: #{double_conv.2} parent=27 // pred_fallthru
        _
      // Predicated region
      $region33: #{double_conv.2} parent=27 // pred_check
        %p530 = pneg %p106
      $region34: #{double_conv.2} parent=27 // pred_check_branch
        %532 = sbr.rel (%p530) target = $region36
      $region35: #{double_conv.2} parent=27 // pred_region
        _
      $region36: #{double_conv.2} parent=27 // pred_fallthru
        _
    $region28: #{double_conv.2} parent=5 // pred_fallthru
      _
    %p533 = scmp.le.s32.totalorder 2, %s10
    // Predicated region
    $region37: #{double_conv.2} parent=5 // pred_check
      %p534 = pneg %p533
    $region38: #{double_conv.2} parent=5 // pred_check_branch
      %536 = sbr.rel (%p534) target = $region40
    $region39: #{double_conv.2} parent=5 // pred_region
      %s537 = ssub.s32 %s10, 2
      // Predicated region
      $region41: #{double_conv.2} parent=39 // pred_check
        %p538 = pneg %p86
      $region42: #{double_conv.2} parent=39 // pred_check_branch
        %540 = sbr.rel (%p538) target = $region44
      $region43: #{double_conv.2} parent=39 // pred_region
        %s541 = smul.u32 2, %s16
        %p542 = scmp.lt.s32.totalorder %s541, 3
        %s543 = scalar_select %p542, %s541, 3
        %s544 = smul.addr %s543, 8
        %s545 = scalar_lea.vmem %s2, %s544
      $region44: #{double_conv.2} parent=39 // pred_fallthru
        _
      // Predicated region
      $region45: #{double_conv.2} parent=39 // pred_check
        %p546 = pneg %p112
      $region46: #{double_conv.2} parent=39 // pred_check_branch
        %548 = sbr.rel (%p546) target = $region48
      $region47: #{double_conv.2} parent=39 // pred_region
        %p549 = scmp.lt.s32.totalorder %s16, 1
        %s550 = scalar_select %p549, %s16, 1
        %s551 = smul.addr %s550, 2
        %s552 = scalar_lea.vmem %s3, %s551
      $region48: #{double_conv.2} parent=39 // pred_fallthru
        _
    $region40: #{double_conv.2} parent=5 // pred_fallthru
      _
  $region6: #{double_conv.2} parent=0 // loop_footer
    %s14 = sadd.s32 1, %s10
  $region7: #{double_conv.2} parent=0 // loop_footer_branch
    %9 = sbr.rel target = $region3
  $region8: #{double_conv.2} parent=0 // loop_exit
    _

// kernel: double_conv.3
$region0: #{double_conv.3}
  #allocation0 [shape = 'u32[]', space=smem, size = 0x4, offset = 0x4, fixed_abs, tag = 'smem constant byte address 0x4 - core index']
  #allocation1 [shape = 'u32[144,128]{1,0:T(1,128)}', space=vmem, size = 0x12000, scoped, tag = 'internal scratch']
  #allocation2 [shape = 'f32[16,384]{1,0:T(8,128)}', space=vmem, size = 0x6000, scoped, tag = 'scratch operand']
  %s0 = inlined_call_operand.vmem [shape: f32[32,128], index: 0, kind: input, shape index: {}]
  %s1 = inlined_call_operand.vmem [shape: bf16[384,128], index: 1, kind: input, shape index: {}]
  %s2 = inlined_call_operand.vmem [shape: f32[1,128], index: 2, kind: input, shape index: {}]
  %s3 = inlined_call_operand.vmem [shape: f32[1,128], index: 3, kind: input, shape index: {}]
  %s4 = inlined_call_operand.vmem [shape: f32[32,128], index: 4, kind: output, shape index: {0}]
  %s5 = inlined_call_operand.vmem [shape: f32[2,2,128], index: 5, kind: output, shape index: {1}]
  %6 = xla_tuple %s4, %s5
  %s7 = sld [smem:[#allocation0]]
  $region57: #{double_conv.3} parent=0
    _
  %s9 = ssub.s32 1, %s7
  %s10 = scalar_select 0, %s9, %s7
  loop: start=0, step=1, limit=4
  $region2: #{double_conv.3} parent=0 // loop_pre_header
    _
  $region3: #{double_conv.3} parent=0 // loop_header
    %s12 = sphi 0, %s16
    %p13 = scmp.ge.s32.totalorder %s12, 4
    %s22 = sphi 0, %s24
    %s25 = sphi 0, %s22
    %s26 = sphi 0, %s25
    %s42 = sphi 0, %s26
    %s46 = sphi 0, %s46
    %s48 = sphi 0, %s46
    %s49 = sphi 0, %s48
    %s63 = sphi 0, %s49
    %s67 = sphi 0, %s67
    %s69 = sphi 0, %s67
    %s70 = sphi 0, %s69
    %s84 = sphi 0, %s70
    %s88 = sphi 0, %s88
    %s90 = sphi 0, %s88
    %s91 = sphi 0, %s90
    %s105 = sphi 0, %s91
    %s111 = sphi 0, %s113
    %s114 = sphi 0, %s111
    %s115 = sphi 0, %s114
    %s131 = sphi 0, %s115
    %s137 = sphi 0, %s139
    %s140 = sphi 0, %s137
    %s141 = sphi 0, %s140
    %s157 = sphi 0, %s141
  $region4: #{double_conv.3} parent=0 // loop_header_branch
    %15 = sbr.rel (%p13) target = $region8
  $region5: #{double_conv.3} parent=0 // loop_body
    %s17 = ssub.s32 %s12, 1
    %s18 = ssub.s32 %s12, 2
    %s19 = sadd.s32 %s12, 1
    %s20 = ssub.s32 %s12, %s19
    %p21 = scmp.eq.s32.totalorder %s20, 0
    %s23 = sadd.s32 %s22, 1
    %s24 = scalar_select %p21, %s22, %s23
    %p27 = pneg %p21
    %p28 = scmp.eq.s32.totalorder %s12, 1
    %p29 = por %p27, %p28
    %p30 = scmp.ne.s32.totalorder %s22, %s25
    %p31 = scmp.eq.s32.totalorder %s12, 0
    %p32 = por %p30, %p31
    %p33 = scmp.ne.s32.totalorder %s22, %s25
    %p34 = scmp.eq.s32.totalorder %s17, 1
    %p35 = por %p33, %p34
    %p36 = scmp.ne.s32.totalorder %s25, %s26
    %p37 = scmp.eq.s32.totalorder %s17, 0
    %p38 = por %p36, %p37
    %p39 = scmp.ne.s32.totalorder %s25, %s26
    %p40 = scmp.eq.s32.totalorder %s18, 1
    %p41 = por %p39, %p40
    %p43 = scmp.ne.s32.totalorder %s26, %s42
    %p44 = scmp.eq.s32.totalorder %s18, 0
    %p45 = por %p43, %p44
    %s47 = sadd.s32 %s46, 1
    %p50 = scmp.eq.s32.totalorder %s12, 1
    %p51 = scmp.ne.s32.totalorder %s46, %s48
    %p52 = scmp.eq.s32.totalorder %s12, 0
    %p53 = por %p51, %p52
    %p54 = scmp.ne.s32.totalorder %s46, %s48
    %p55 = scmp.eq.s32.totalorder %s17, 1
    %p56 = por %p54, %p55
    %p57 = scmp.ne.s32.totalorder %s48, %s49
    %p58 = scmp.eq.s32.totalorder %s17, 0
    %p59 = por %p57, %p58
    %p60 = scmp.ne.s32.totalorder %s48, %s49
    %p61 = scmp.eq.s32.totalorder %s18, 1
    %p62 = por %p60, %p61
    %p64 = scmp.ne.s32.totalorder %s49, %s63
    %p65 = scmp.eq.s32.totalorder %s18, 0
    %p66 = por %p64, %p65
    %s68 = sadd.s32 %s67, 1
    %p71 = scmp.eq.s32.totalorder %s12, 1
    %p72 = scmp.ne.s32.totalorder %s67, %s69
    %p73 = scmp.eq.s32.totalorder %s12, 0
    %p74 = por %p72, %p73
    %p75 = scmp.ne.s32.totalorder %s67, %s69
    %p76 = scmp.eq.s32.totalorder %s17, 1
    %p77 = por %p75, %p76
    %p78 = scmp.ne.s32.totalorder %s69, %s70
    %p79 = scmp.eq.s32.totalorder %s17, 0
    %p80 = por %p78, %p79
    %p81 = scmp.ne.s32.totalorder %s69, %s70
    %p82 = scmp.eq.s32.totalorder %s18, 1
    %p83 = por %p81, %p82
    %p85 = scmp.ne.s32.totalorder %s70, %s84
    %p86 = scmp.eq.s32.totalorder %s18, 0
    %p87 = por %p85, %p86
    %s89 = sadd.s32 %s88, 1
    %p92 = scmp.eq.s32.totalorder %s12, 1
    %p93 = scmp.ne.s32.totalorder %s88, %s90
    %p94 = scmp.eq.s32.totalorder %s12, 0
    %p95 = por %p93, %p94
    %p96 = scmp.ne.s32.totalorder %s88, %s90
    %p97 = scmp.eq.s32.totalorder %s17, 1
    %p98 = por %p96, %p97
    %p99 = scmp.ne.s32.totalorder %s90, %s91
    %p100 = scmp.eq.s32.totalorder %s17, 0
    %p101 = por %p99, %p100
    %p102 = scmp.ne.s32.totalorder %s90, %s91
    %p103 = scmp.eq.s32.totalorder %s18, 1
    %p104 = por %p102, %p103
    %p106 = scmp.ne.s32.totalorder %s91, %s105
    %p107 = scmp.eq.s32.totalorder %s18, 0
    %p108 = por %p106, %p107
    %s109 = ssub.s32 %s12, %s19
    %p110 = scmp.eq.s32.totalorder %s109, 0
    %s112 = sadd.s32 %s111, 1
    %s113 = scalar_select %p110, %s111, %s112
    %p116 = pneg %p110
    %p117 = scmp.eq.s32.totalorder %s12, 1
    %p118 = por %p116, %p117
    %p119 = scmp.ne.s32.totalorder %s111, %s114
    %p120 = scmp.eq.s32.totalorder %s12, 0
    %p121 = por %p119, %p120
    %p122 = scmp.ne.s32.totalorder %s111, %s114
    %p123 = scmp.eq.s32.totalorder %s17, 1
    %p124 = por %p122, %p123
    %p125 = scmp.ne.s32.totalorder %s114, %s115
    %p126 = scmp.eq.s32.totalorder %s17, 0
    %p127 = por %p125, %p126
    %p128 = scmp.ne.s32.totalorder %s114, %s115
    %p129 = scmp.eq.s32.totalorder %s18, 1
    %p130 = por %p128, %p129
    %p132 = scmp.ne.s32.totalorder %s115, %s131
    %p133 = scmp.eq.s32.totalorder %s18, 0
    %p134 = por %p132, %p133
    %s135 = ssub.s32 %s12, %s19
    %p136 = scmp.eq.s32.totalorder %s135, 0
    %s138 = sadd.s32 %s137, 1
    %s139 = scalar_select %p136, %s137, %s138
    %p142 = pneg %p136
    %p143 = scmp.eq.s32.totalorder %s12, 1
    %p144 = por %p142, %p143
    %p145 = scmp.ne.s32.totalorder %s137, %s140
    %p146 = scmp.eq.s32.totalorder %s12, 0
    %p147 = por %p145, %p146
    %p148 = scmp.ne.s32.totalorder %s137, %s140
    %p149 = scmp.eq.s32.totalorder %s17, 1
    %p150 = por %p148, %p149
    %p151 = scmp.ne.s32.totalorder %s140, %s141
    %p152 = scmp.eq.s32.totalorder %s17, 0
    %p153 = por %p151, %p152
    %p154 = scmp.ne.s32.totalorder %s140, %s141
    %p155 = scmp.eq.s32.totalorder %s18, 1
    %p156 = por %p154, %p155
    %p158 = scmp.ne.s32.totalorder %s141, %s157
    %p159 = scmp.eq.s32.totalorder %s18, 0
    %p160 = por %p158, %p159
    %p161 = scmp.le.s32.totalorder 1, %s12
    %p162 = scmp.lt.s32.totalorder %s12, 3
    %p163 = pnand %p161, %p162
    %p164 = pneg %p163
    // Predicated region
    $region9: #{double_conv.3} parent=5 // pred_check
      _
    $region10: #{double_conv.3} parent=5 // pred_check_branch
      %166 = sbr.rel (%p163) target = $region12
    $region11: #{double_conv.3} parent=5 // pred_region
      %s167 = ssub.s32 %s12, 1
      // Predicated region
      $region13: #{double_conv.3} parent=11 // pred_check
        %p168 = pneg %p59
      $region14: #{double_conv.3} parent=11 // pred_check_branch
        %170 = sbr.rel (%p168) target = $region16
      $region15: #{double_conv.3} parent=11 // pred_region
        _
      $region16: #{double_conv.3} parent=11 // pred_fallthru
        _
      // Predicated region
      $region17: #{double_conv.3} parent=11 // pred_check
        %p171 = pneg %p80
      $region18: #{double_conv.3} parent=11 // pred_check_branch
        %173 = sbr.rel (%p171) target = $region20
      $region19: #{double_conv.3} parent=11 // pred_region
        _
      $region20: #{double_conv.3} parent=11 // pred_fallthru
        _
      // Predicated region
      $region21: #{double_conv.3} parent=11 // pred_check
        %p174 = pneg %p101
      $region22: #{double_conv.3} parent=11 // pred_check_branch
        %176 = sbr.rel (%p174) target = $region24
      $region23: #{double_conv.3} parent=11 // pred_region
        _
      $region24: #{double_conv.3} parent=11 // pred_fallthru
        _
    $region12: #{double_conv.3} parent=5 // pred_fallthru
      _
    %p177 = scmp.lt.s32.totalorder %s12, 2
    // Predicated region
    $region25: #{double_conv.3} parent=5 // pred_check
      %p178 = pneg %p177
    $region26: #{double_conv.3} parent=5 // pred_check_branch
      %180 = sbr.rel (%p178) target = $region28
    $region27: #{double_conv.3} parent=5 // pred_region
      // Predicated region
      $region29: #{double_conv.3} parent=27 // pred_check
        %p181 = pneg %p32
      $region30: #{double_conv.3} parent=27 // pred_check_branch
        %183 = sbr.rel (%p181) target = $region32
      $region31: #{double_conv.3} parent=27 // pred_region
        %s184 = smul.u32 2, %s12
        %p185 = scmp.lt.s32.totalorder %s184, 3
        %s186 = scalar_select %p185, %s184, 3
        %s187 = smul.addr %s186, 8
        %s188 = scalar_lea.vmem %s0, %s187
        %s189 = smul.u32 2, %s12
      $region32: #{double_conv.3} parent=27 // pred_fallthru
        _
    $region28: #{double_conv.3} parent=5 // pred_fallthru
      _
    %p190 = scmp.le.s32.totalorder 1, %s12
    %p191 = scmp.lt.s32.totalorder %s12, 3
    %p192 = pnand %p190, %p191
    %p193 = pneg %p192
    // Predicated region
    $region33: #{double_conv.3} parent=5 // pred_check
      _
    $region34: #{double_conv.3} parent=5 // pred_check_branch
      %195 = sbr.rel (%p192) target = $region36
    $region35: #{double_conv.3} parent=5 // pred_region
      %s196 = ssub.s32 %s12, 1
      %s197 = smul.u32 2, %s17
      %p198 = scmp.lt.s32.totalorder %s197, 3
      %s199 = scalar_select %p198, %s197, 3
      %s200 = smul.addr %s199, 8
      %s201 = scalar_lea.vmem %s0, %s200
      %p202 = pneg %p38
      %p203 = pneg %p35
      %p204 = pneg %p59
      %p205 = pneg %p56
      %p206 = pneg %p80
      %p207 = pneg %p77
      %p208 = pneg %p101
      %p209 = pneg %p98
      %p210 = pneg %p127
      %p211 = pneg %p124
      %s212 = smul.u32 2, %s17
      %p213 = scmp.lt.s32.totalorder %s212, 3
      %s214 = scalar_select %p213, %s212, 3
      %s215 = smul.addr %s214, 8
      %s216 = scalar_lea.vmem %s4, %s215
      %p217 = pneg %p153
      %p218 = pneg %p150
      %p219 = scmp.lt.s32.totalorder %s17, 1
      %s220 = scalar_select %p219, %s17, 1
      %s221 = smul.addr %s220, 2
      %s222 = scalar_lea.vmem %s5, %s221
      %s223 = smul.u32 2, %s17
      %p224 = scmp.lt.s32.totalorder %s223, 3
      %s225 = scalar_select %p224, %s223, 3
      %s226 = smul.addr %s225, 8
      %s227 = scalar_lea.vmem %s0, %s226
      %s228 = smul.u32 2, %s17
      %s229 = smul.u32 2, %s17
      %p230 = scmp.lt.s32.totalorder %s229, 3
      %s231 = scalar_select %p230, %s229, 3
      %s232 = smul.addr %s231, 8
      %s233 = scalar_lea.vmem %s4, %s232
      %s234 = smul.u32 2, %s17
      %p235 = scmp.lt.s32.totalorder %s17, 1
      %s236 = scalar_select %p235, %s17, 1
      %s237 = smul.addr %s236, 2
      %s238 = scalar_lea.vmem %s5, %s237
      %v240 = vld [vmem:[%s227] sm:$0xff]
      %v241 = vld [vmem:[%s227 + $0x8] sm:$0xff]
      %v242 = vld [vmem:[%s2] sm:$0x1]
      %v244 = vlaneseq
      %v245 = vshrl.u32 %v244, 7
      %v246 = vsub.s32 0, %v245
      %v247 = vrot.slane %v242, %v246
      %v249 = vmul.f32 %v240, %v247
      %v250 = vmul.f32 %v241, %v247
      %v251 = vld [vmem:[%s3] sm:$0x1]
      %v253 = vlaneseq
      %v254 = vshrl.u32 %v253, 7
      %v255 = vsub.s32 0, %v254
      %v256 = vrot.slane %v251, %v255
      %v258 = vadd.f32 %v249, %v256
      %v259 = vadd.f32 %v250, %v256
      %v260 = vmax.f32 %v258, 0.0
      %v261 = vmax.f32 %v259, 0.0
      %262 = vst [vmem:[#allocation2 + $0x8] sm:$0xff] %v260
      %263 = vst [vmem:[#allocation2 + $0x20] sm:$0xff] %v261
      %vm266 = vcmask 1040384
      %v267 = vrot.slane %v260, 7
      %v268 = vrot.slane %v261, 7
      %v269 = vsel %vm266, %v267, %v268
      %272 = vst [vmem:[#allocation2] sm:$0xfe] %v267
      %273 = vst [vmem:[#allocation2 + $0x18] sm:$0xff] %v269
      %vm274 = vcmask 1046528
      %v275 = vrot.slane %v260, 1
      %v276 = vrot.slane %v261, 1
      %v277 = vsel %vm274, %v275, %v276
      %280 = vst [vmem:[#allocation2 + $0x10] sm:$0xff] %v277
      %281 = vst [vmem:[#allocation2 + $0x28] sm:$0x7f] %v276
      %282 = vst [vmem:[#allocation2] sm:$0x1] 0.0
      %283 = vst [vmem:[#allocation2 + $0x2f] sm:$0x1] 0.0
      %v284 = vld [vmem:[#allocation2] sm:$0xff]
      %v285 = vld [vmem:[#allocation2 + $0x8] sm:$0xff]
      %v286 = vld [vmem:[#allocation2 + $0x10] sm:$0xff]
      %v287 = vld [vmem:[#allocation2 + $0x18] sm:$0xff]
      %v288 = vld [vmem:[#allocation2 + $0x20] sm:$0xff]
      %v289 = vld [vmem:[#allocation2 + $0x28] sm:$0xff]
      %v290 = vpack.c.bf16 %v287, %v284
      %v291 = vpack.c.bf16 %v288, %v285
      %v292 = vpack.c.bf16 %v289, %v286
      %v293 = vld [vmem:[%s1] sm:$0xf]
      %v294 = vld [vmem:[%s1 + $0x4] sm:$0xf]
      %v295 = vld [vmem:[%s1 + $0x8] sm:$0xf]
      %v296 = vld [vmem:[%s1 + $0xc] sm:$0xf]
      %v297 = vld [vmem:[%s1 + $0x10] sm:$0xf]
      %v298 = vld [vmem:[%s1 + $0x14] sm:$0xf]
      %v299 = vld [vmem:[%s1 + $0x18] sm:$0xf]
      %v300 = vld [vmem:[%s1 + $0x1c] sm:$0xf]
      %v301 = vld [vmem:[%s1 + $0x20] sm:$0xf]
      %v302 = vld [vmem:[%s1 + $0x24] sm:$0xf]
      %v303 = vld [vmem:[%s1 + $0x28] sm:$0xf]
      %v304 = vld [vmem:[%s1 + $0x2c] sm:$0xf]
      %v305 = vld [vmem:[%s1 + $0x30] sm:$0xf]
      %v306 = vld [vmem:[%s1 + $0x34] sm:$0xf]
      %v307 = vld [vmem:[%s1 + $0x38] sm:$0xf]
      %v308 = vld [vmem:[%s1 + $0x3c] sm:$0xf]
      %v309 = vld [vmem:[%s1 + $0x40] sm:$0xf]
      %v310 = vld [vmem:[%s1 + $0x44] sm:$0xf]
      %v311 = vld [vmem:[%s1 + $0x48] sm:$0xf]
      %v312 = vld [vmem:[%s1 + $0x4c] sm:$0xf]
      %v313 = vld [vmem:[%s1 + $0x50] sm:$0xf]
      %v314 = vld [vmem:[%s1 + $0x54] sm:$0xf]
      %v315 = vld [vmem:[%s1 + $0x58] sm:$0xf]
      %v316 = vld [vmem:[%s1 + $0x5c] sm:$0xf]
      %v317 = vld [vmem:[%s1 + $0x60] sm:$0xf]
      %v318 = vld [vmem:[%s1 + $0x64] sm:$0xf]
      %v319 = vld [vmem:[%s1 + $0x68] sm:$0xf]
      %v320 = vld [vmem:[%s1 + $0x6c] sm:$0xf]
      %v321 = vld [vmem:[%s1 + $0x70] sm:$0xf]
      %v322 = vld [vmem:[%s1 + $0x74] sm:$0xf]
      %v323 = vld [vmem:[%s1 + $0x78] sm:$0xf]
      %v324 = vld [vmem:[%s1 + $0x7c] sm:$0xf]
      %v325 = vld [vmem:[%s1 + $0x80] sm:$0xf]
      %v326 = vld [vmem:[%s1 + $0x84] sm:$0xf]
      %v327 = vld [vmem:[%s1 + $0x88] sm:$0xf]
      %v328 = vld [vmem:[%s1 + $0x8c] sm:$0xf]
      %v329 = vld [vmem:[%s1 + $0x90] sm:$0xf]
      %v330 = vld [vmem:[%s1 + $0x94] sm:$0xf]
      %v331 = vld [vmem:[%s1 + $0x98] sm:$0xf]
      %v332 = vld [vmem:[%s1 + $0x9c] sm:$0xf]
      %v333 = vld [vmem:[%s1 + $0xa0] sm:$0xf]
      %v334 = vld [vmem:[%s1 + $0xa4] sm:$0xf]
      %v335 = vld [vmem:[%s1 + $0xa8] sm:$0xf]
      %v336 = vld [vmem:[%s1 + $0xac] sm:$0xf]
      %v337 = vld [vmem:[%s1 + $0xb0] sm:$0xf]
      %v338 = vld [vmem:[%s1 + $0xb4] sm:$0xf]
      %v339 = vld [vmem:[%s1 + $0xb8] sm:$0xf]
      %v340 = vld [vmem:[%s1 + $0xbc] sm:$0xf]
      %v389 = vunpack.c.l.b16 %v293
      %v390 = vunpack.c.l.b16 %v294
      %v391 = vunpack.c.l.b16 %v295
      %v392 = vunpack.c.l.b16 %v296
      %v393 = vunpack.c.l.b16 %v297
      %v394 = vunpack.c.l.b16 %v298
      %v395 = vunpack.c.l.b16 %v299
      %v396 = vunpack.c.l.b16 %v300
      %v397 = vunpack.c.l.b16 %v301
      %v398 = vunpack.c.l.b16 %v302
      %v399 = vunpack.c.l.b16 %v303
      %v400 = vunpack.c.l.b16 %v304
      %v401 = vunpack.c.l.b16 %v305
      %v402 = vunpack.c.l.b16 %v306
      %v403 = vunpack.c.l.b16 %v307
      %v404 = vunpack.c.l.b16 %v308
      %v405 = vunpack.c.l.b16 %v309
      %v406 = vunpack.c.l.b16 %v310
      %v407 = vunpack.c.l.b16 %v311
      %v408 = vunpack.c.l.b16 %v312
      %v409 = vunpack.c.l.b16 %v313
      %v410 = vunpack.c.l.b16 %v314
      %v411 = vunpack.c.l.b16 %v315
      %v412 = vunpack.c.l.b16 %v316
      %v413 = vunpack.c.l.b16 %v317
      %v414 = vunpack.c.l.b16 %v318
      %v415 = vunpack.c.l.b16 %v319
      %v416 = vunpack.c.l.b16 %v320
      %v417 = vunpack.c.l.b16 %v321
      %v418 = vunpack.c.l.b16 %v322
      %v419 = vunpack.c.l.b16 %v323
      %v420 = vunpack.c.l.b16 %v324
      %v421 = vunpack.c.l.b16 %v325
      %v422 = vunpack.c.l.b16 %v326
      %v423 = vunpack.c.l.b16 %v327
      %v424 = vunpack.c.l.b16 %v328
      %v425 = vunpack.c.l.b16 %v329
      %v426 = vunpack.c.l.b16 %v330
      %v427 = vunpack.c.l.b16 %v331
      %v428 = vunpack.c.l.b16 %v332
      %v429 = vunpack.c.l.b16 %v333
      %v430 = vunpack.c.l.b16 %v334
      %v431 = vunpack.c.l.b16 %v335
      %v432 = vunpack.c.l.b16 %v336
      %v433 = vunpack.c.l.b16 %v337
      %v434 = vunpack.c.l.b16 %v338
      %v435 = vunpack.c.l.b16 %v339
      %v436 = vunpack.c.l.b16 %v340
      %v437 = vpack.c.b16 %v390, %v389
      %v438 = vpack.c.b16 %v392, %v391
      %v439 = vpack.c.b16 %v394, %v393
      %v440 = vpack.c.b16 %v396, %v395
      %v441 = vpack.c.b16 %v398, %v397
      %v442 = vpack.c.b16 %v400, %v399
      %v443 = vpack.c.b16 %v402, %v401
      %v444 = vpack.c.b16 %v404, %v403
      %v445 = vpack.c.b16 %v406, %v405
      %v446 = vpack.c.b16 %v408, %v407
      %v447 = vpack.c.b16 %v410, %v409
      %v448 = vpack.c.b16 %v412, %v411
      %v449 = vpack.c.b16 %v414, %v413
      %v450 = vpack.c.b16 %v416, %v415
      %v451 = vpack.c.b16 %v418, %v417
      %v452 = vpack.c.b16 %v420, %v419
      %v453 = vpack.c.b16 %v422, %v421
      %v454 = vpack.c.b16 %v424, %v423
      %v455 = vpack.c.b16 %v426, %v425
      %v456 = vpack.c.b16 %v428, %v427
      %v457 = vpack.c.b16 %v430, %v429
      %v458 = vpack.c.b16 %v432, %v431
      %v459 = vpack.c.b16 %v434, %v433
      %v460 = vpack.c.b16 %v436, %v435
      %485 = vmatprep.subr.bf16.mxu0 0
      %486 = vmatpush1.bf16.msra.mxu0 %v437
      %487 = vmatprep.subr.bf16.mxu0 0
      %488 = vmatpush1.bf16.msra.mxu0 %v438
      %489 = vmatprep.subr.bf16.mxu0 0
      %490 = vmatpush1.bf16.msra.mxu0 %v439
      %491 = vmatprep.subr.bf16.mxu0 0
      %492 = vmatpush1.bf16.msra.mxu0 %v440
      %493 = vmatprep.subr.bf16.mxu0 0
      %494 = vmatpush1.bf16.msra.mxu0 %v441
      %495 = vmatprep.subr.bf16.mxu0 0
      %496 = vmatpush1.bf16.msra.mxu0 %v442
      %497 = vmatprep.subr.bf16.mxu0 0
      %498 = vmatpush1.bf16.msra.mxu0 %v443
      %499 = vmatprep.subr.bf16.mxu0 0
      %500 = vmatpush1.bf16.msra.mxu0 %v444
      %501 = vmatprep.subr.bf16.mxu0 0
      %502 = vmatpush1.bf16.msra.mxu0 %v445
      %503 = vmatprep.subr.bf16.mxu0 0
      %504 = vmatpush1.bf16.msra.mxu0 %v446
      %505 = vmatprep.subr.bf16.mxu0 0
      %506 = vmatpush1.bf16.msra.mxu0 %v447
      %507 = vmatprep.subr.bf16.mxu0 0
      %508 = vmatpush1.bf16.msra.mxu0 %v448
      %509 = vmatprep.subr.bf16.mxu0 0
      %510 = vmatpush1.bf16.msra.mxu0 %v449
      %511 = vmatprep.subr.bf16.mxu0 0
      %512 = vmatpush1.bf16.msra.mxu0 %v450
      %513 = vmatprep.subr.bf16.mxu0 0
      %514 = vmatpush1.bf16.msra.mxu0 %v451
      %515 = vmatprep.subr.bf16.mxu0 0
      %516 = vmatpush1.bf16.msra.mxu0 %v452
      %517 = vmatprep.mubr.bf16.mxu0 %v291
      %518 = vmatmul.mubr.bf16.gmra.mrb[0].mxu0 %v290
      %v519 = vpop.f32.mrb[0].mxu0
      %v520 = vadd.f32 0.0, %v519
      %v521 = vpop.f32.mrb[0].mxu0
      %v522 = vpop.f32.mrb[0].mxu0
      %v523 = vadd.f32 0.0, %v522
      %v524 = vpop.f32.mrb[0].mxu0
      %525 = vdwg.mxu0
      %526 = vmatprep.subr.bf16.mxu0 0
      %527 = vmatpush1.bf16.msra.mxu0 %v453
      %528 = vmatprep.subr.bf16.mxu0 0
      %529 = vmatpush1.bf16.msra.mxu0 %v454
      %530 = vmatprep.subr.bf16.mxu0 0
      %531 = vmatpush1.bf16.msra.mxu0 %v455
      %532 = vmatprep.subr.bf16.mxu0 0
      %533 = vmatpush1.bf16.msra.mxu0 %v456
      %534 = vmatprep.subr.bf16.mxu0 0
      %535 = vmatpush1.bf16.msra.mxu0 %v457
      %536 = vmatprep.subr.bf16.mxu0 0
      %537 = vmatpush1.bf16.msra.mxu0 %v458
      %538 = vmatprep.subr.bf16.mxu0 0
      %539 = vmatpush1.bf16.msra.mxu0 %v459
      %540 = vmatprep.subr.bf16.mxu0 0
      %541 = vmatpush1.bf16.msra.mxu0 %v460
      %542 = vmatprep.subr.bf16.mxu0 0
      %543 = vmatpush1.bf16.msra.mxu0 0
      %544 = vmatprep.subr.bf16.mxu0 0
      %545 = vmatpush1.bf16.msra.mxu0 0
      %546 = vmatprep.subr.bf16.mxu0 0
      %547 = vmatpush1.bf16.msra.mxu0 0
      %548 = vmatprep.subr.bf16.mxu0 0
      %549 = vmatpush1.bf16.msra.mxu0 0
      %550 = vmatprep.subr.bf16.mxu0 0
      %551 = vmatpush1.bf16.msra.mxu0 0
      %552 = vmatprep.subr.bf16.mxu0 0
      %553 = vmatpush1.bf16.msra.mxu0 0
      %554 = vmatprep.subr.bf16.mxu0 0
      %555 = vmatpush1.bf16.msra.mxu0 0
      %556 = vmatprep.subr.bf16.mxu0 0
      %557 = vmatpush1.bf16.msra.mxu0 0
      %558 = vmatprep.mubr.bf16.mxu0 0
      %559 = vmatmul.mubr.bf16.gmra.mrb[0].mxu0 %v292
      %v560 = vpop.f32.mrb[0].mxu0
      %v561 = vadd.f32 %v520, %v560
      %v562 = vpop.f32.mrb[0].mxu0
      %v563 = vpop.f32.mrb[0].mxu0
      %v564 = vadd.f32 %v523, %v563
      %v565 = vpop.f32.mrb[0].mxu0
      %566 = vdwg.mxu0
      %567 = vst [vmem:[%s233] sm:$0xff] %v561
      %568 = vst [vmem:[%s233 + $0x8] sm:$0xff] %v564
      %v569 = vadd.f32 %v561, %v564
      %v570 = vrot.slane %v569, 4
      %v571 = vadd.f32 %v569, %v570
      %v572 = vrot.slane %v571, 2
      %v573 = vadd.f32 %v571, %v572
      %v574 = vrot.slane %v573, 1
      %v575 = vadd.f32 %v573, %v574
      %v576 = vrcp.pop 16.0
      %v577 = vmul.f32 %v575, %v576
      %v578 = vsub.f32 %v561, %v577
      %v579 = vsub.f32 %v564, %v577
      %580 = vst [vmem:[%s238] sm:$0x1] %v577
      %v581 = vmul.f32 %v578, %v578
      %v582 = vmul.f32 %v579, %v579
      %v583 = vadd.f32 %v581, %v582
      %v584 = vrot.slane %v583, 4
      %v585 = vadd.f32 %v583, %v584
      %v586 = vrot.slane %v585, 2
      %v587 = vadd.f32 %v585, %v586
      %v588 = vrot.slane %v587, 1
      %v589 = vadd.f32 %v587, %v588
      %590 = vst [vmem:[%s238 + $0x1] sm:$0x1] %v589
      %s591 = smul.u32 2, %s17
      %p592 = scmp.lt.s32.totalorder %s591, 3
      %s593 = scalar_select %p592, %s591, 3
      %s594 = smul.addr %s593, 8
      %s595 = scalar_lea.vmem %s4, %s594
      %p596 = scmp.lt.s32.totalorder %s17, 1
      %s597 = scalar_select %p596, %s17, 1
      %s598 = smul.addr %s597, 2
      %s599 = scalar_lea.vmem %s5, %s598
      // Predicated region
      $region37: #{double_conv.3} parent=35 // pred_check
        %p600 = pneg %p124
      $region38: #{double_conv.3} parent=35 // pred_check_branch
        %602 = sbr.rel (%p600) target = $region40
      $region39: #{double_conv.3} parent=35 // pred_region
        %s603 = smul.u32 2, %s17
      $region40: #{double_conv.3} parent=35 // pred_fallthru
        _
      // Predicated region
      $region41: #{double_conv.3} parent=35 // pred_check
        %p604 = pneg %p150
      $region42: #{double_conv.3} parent=35 // pred_check_branch
        %606 = sbr.rel (%p604) target = $region44
      $region43: #{double_conv.3} parent=35 // pred_region
        _
      $region44: #{double_conv.3} parent=35 // pred_fallthru
        _
    $region36: #{double_conv.3} parent=5 // pred_fallthru
      _
    %p607 = scmp.le.s32.totalorder 2, %s12
    // Predicated region
    $region45: #{double_conv.3} parent=5 // pred_check
      %p608 = pneg %p607
    $region46: #{double_conv.3} parent=5 // pred_check_branch
      %610 = sbr.rel (%p608) target = $region48
    $region47: #{double_conv.3} parent=5 // pred_region
      %s611 = ssub.s32 %s12, 2
      // Predicated region
      $region49: #{double_conv.3} parent=47 // pred_check
        %p612 = pneg %p130
      $region50: #{double_conv.3} parent=47 // pred_check_branch
        %614 = sbr.rel (%p612) target = $region52
      $region51: #{double_conv.3} parent=47 // pred_region
        %s615 = smul.u32 2, %s18
        %p616 = scmp.lt.s32.totalorder %s615, 3
        %s617 = scalar_select %p616, %s615, 3
        %s618 = smul.addr %s617, 8
        %s619 = scalar_lea.vmem %s4, %s618
      $region52: #{double_conv.3} parent=47 // pred_fallthru
        _
      // Predicated region
      $region53: #{double_conv.3} parent=47 // pred_check
        %p620 = pneg %p156
      $region54: #{double_conv.3} parent=47 // pred_check_branch
        %622 = sbr.rel (%p620) target = $region56
      $region55: #{double_conv.3} parent=47 // pred_region
        %p623 = scmp.lt.s32.totalorder %s18, 1
        %s624 = scalar_select %p623, %s18, 1
        %s625 = smul.addr %s624, 2
        %s626 = scalar_lea.vmem %s5, %s625
      $region56: #{double_conv.3} parent=47 // pred_fallthru
        _
    $region48: #{double_conv.3} parent=5 // pred_fallthru
      _
  $region6: #{double_conv.3} parent=0 // loop_footer
    %s16 = sadd.s32 1, %s12
  $region7: #{double_conv.3} parent=0 // loop_footer_branch
    %11 = sbr.rel target = $region3
  $region8: #{double_conv.3} parent=0 // loop_exit
    _

</llo_original>
